<compile_context>
chip_gen: v7x
topology: tpu7x:2x2x1
jax: 0.10.0
libtpu: 0.0.40
codegen_flags: <defaults>
</compile_context>

<pallas_src>
import functools

import jax
import jax.numpy as jnp
from jax.experimental import pallas as pl
from jax.experimental.pallas import tpu as pltpu

K_STEPS = 5
ALPHA = 0.1
LANE = 128
NEG_BIG = -1e30

TM_MAX = 256   # output-row tile (multiple of 128, MXU friendly on all gens)
TK_MAX = 512   # reduction (neighbor) tile


def _round_up(x, m):
    return (x + m - 1) // m * m


def _choose_tiling(n):
    """Pad N to a lane multiple and pick row/reduction tiles that divide it."""
    n_pad = _round_up(max(n, LANE), LANE)
    tm = min(TM_MAX, n_pad)
    while n_pad % tm:
        tm -= LANE
    tk = min(TK_MAX, n_pad)
    while n_pad % tk:
        tk -= LANE
    return n_pad, tm, tk


# ----------------------------------------------------------------------------
# MLP prologue: z = relu(x @ W1 + b1) @ W2 + b2   (row-tiled, runs once)
# ----------------------------------------------------------------------------
def mlp_kernel(x_ref, w1_ref, b1_ref, w2_ref, b2_ref, z_ref):
    h = jnp.dot(x_ref[...], w1_ref[...],
                preferred_element_type=jnp.float32) + b1_ref[...]
    h = jnp.maximum(h, 0.0)
    z_ref[...] = jnp.dot(h, w2_ref[...],
                         preferred_element_type=jnp.float32) + b2_ref[...]


def mlp_forward(x_pad, w1, b1_2d, w2_pad, b2_pad, *, tm):
    n_pad, nfeat = x_pad.shape
    hidden = w1.shape[1]
    c_pad = w2_pad.shape[1]
    return pl.pallas_call(
        mlp_kernel,
        out_shape=jax.ShapeDtypeStruct((n_pad, c_pad), jnp.float32),
        grid_spec=pltpu.PrefetchScalarGridSpec(
            num_scalar_prefetch=0,
            grid=(n_pad // tm,),
            in_specs=[
                pl.BlockSpec((tm, nfeat), lambda i: (i, 0)),
                pl.BlockSpec((nfeat, hidden), lambda i: (0, 0)),
                pl.BlockSpec((1, hidden), lambda i: (0, 0)),
                pl.BlockSpec((hidden, c_pad), lambda i: (0, 0)),
                pl.BlockSpec((1, c_pad), lambda i: (0, 0)),
            ],
            out_specs=pl.BlockSpec((tm, c_pad), lambda i: (i, 0)),
        ),
        compiler_params=pltpu.CompilerParams(
            dimension_semantics=("parallel",)),
    )(x_pad, w1, b1_2d, w2_pad, b2_pad)


# ----------------------------------------------------------------------------
# One APPNP propagation step: p_new = (1-alpha) * A_hat @ p + alpha * z
# (log_softmax fused into the finalize of the final step)
# ----------------------------------------------------------------------------
def prop_kernel(a_ref, p_ref, z_ref, out_ref, acc_ref, *,
                nclass, finalize_log_softmax):
    k = pl.program_id(1)

    @pl.when(k == 0)
    def _():
        acc_ref[...] = jnp.zeros_like(acc_ref)

    # bf16 x bf16 MXU matmul with f32 accumulation (A_hat stored bf16 in HBM).
    acc_ref[...] += jnp.dot(a_ref[...], p_ref[...].astype(jnp.bfloat16),
                            preferred_element_type=jnp.float32)

    @pl.when(k == pl.num_programs(1) - 1)
    def _():
        p_new = (1.0 - ALPHA) * acc_ref[...] + ALPHA * z_ref[...]
        if finalize_log_softmax:
            col = jax.lax.broadcasted_iota(jnp.int32, p_new.shape, 1)
            masked = jnp.where(col < nclass, p_new, NEG_BIG)  # kill padded lanes
            m = jnp.max(masked, axis=-1, keepdims=True)
            shifted = masked - m
            lse = jnp.log(jnp.sum(jnp.exp(shifted), axis=-1, keepdims=True))
            p_new = shifted - lse
        out_ref[...] = p_new


def propagate_step(a_bf16, p, z_pad, *, tm, tk, nclass, finalize):
    n_pad = a_bf16.shape[0]
    c_pad = p.shape[1]

    # Explicit scoped-VMEM budget: 2x double-buffered tiles + accumulator,
    # with 2x headroom, clamped to a range safe on v5e/v6e/v7x.
    tile_bytes = (2 * tm * tk * 2        # A_hat bf16 (double-buffered)
                  + 2 * tk * c_pad * 4   # p tile
                  + 2 * tm * c_pad * 4   # z tile
                  + 2 * tm * c_pad * 4   # out tile
                  + tm * c_pad * 4)      # accumulator scratch
    vmem_limit = int(min(48 * 1024 * 1024,
                         max(16 * 1024 * 1024, 2 * tile_bytes)))

    kernel = functools.partial(prop_kernel, nclass=nclass,
                               finalize_log_softmax=finalize)
    return pl.pallas_call(
        kernel,
        out_shape=jax.ShapeDtypeStruct((n_pad, c_pad), jnp.float32),
        grid_spec=pltpu.PrefetchScalarGridSpec(
            num_scalar_prefetch=0,
            grid=(n_pad // tm, n_pad // tk),
            in_specs=[
                pl.BlockSpec((tm, tk), lambda i, k: (i, k)),       # A_hat tile
                pl.BlockSpec((tk, c_pad), lambda i, k: (k, 0)),    # p tile
                pl.BlockSpec((tm, c_pad), lambda i, k: (i, 0)),    # z tile
            ],
            out_specs=pl.BlockSpec((tm, c_pad), lambda i, k: (i, 0)),
            scratch_shapes=[pltpu.VMEM((tm, c_pad), jnp.float32)],
        ),
        compiler_params=pltpu.CompilerParams(
            dimension_semantics=("parallel", "arbitrary"),
            vmem_limit_bytes=vmem_limit),
    )(a_bf16, p, z_pad)


# ----------------------------------------------------------------------------
# Full forward
# ----------------------------------------------------------------------------
def appnp_forward(x, w1, b1, w2, b2, a_hat):
    n, nfeat = x.shape
    hidden = w1.shape[1]
    nclass = w2.shape[1]

    n_pad, tm, tk = _choose_tiling(n)
    c_pad = _round_up(max(nclass, LANE), LANE)   # lane-dense class dim

    # Pad inputs (padded rows/cols of A_hat and padded class cols are zero, so
    # they never leak into real outputs; padded outputs are sliced off).
    x_pad = jnp.zeros((n_pad, nfeat), jnp.float32).at[:n].set(x)
    w2_pad = jnp.zeros((hidden, c_pad), jnp.float32).at[:, :nclass].set(w2)
    b2_pad = jnp.zeros((1, c_pad), jnp.float32).at[:, :nclass].set(
        b2.reshape(1, -1))
    b1_2d = b1.reshape(1, -1)
    a_pad = jnp.zeros((n_pad, n_pad), jnp.float32).at[:n, :n].set(a_hat)
    a_bf16 = a_pad.astype(jnp.bfloat16)          # halves dominant HBM traffic

    # Prologue MLP (tiny) -> z, kept resident only as [N_pad, 128] f32.
    z_pad = mlp_forward(x_pad, w1, b1_2d, w2_pad, b2_pad, tm=tm)

    # K propagation steps: stream A_hat from HBM once per step.
    p = z_pad
    for step in range(K_STEPS):
        p = propagate_step(a_bf16, p, z_pad, tm=tm, tk=tk, nclass=nclass,
                           finalize=(step == K_STEPS - 1))
    return p[:n, :nclass]


def build_gcn_norm_adj(edge_index, num_nodes):
    """Dense symmetric-normalized adjacency with self-loops (PyG gcn_norm)."""
    src = edge_index[0]
    dst = edge_index[1]
    adj = jnp.zeros((num_nodes, num_nodes), jnp.float32)
    adj = adj.at[dst, src].add(1.0)                     # aggregate at target
    adj = adj + jnp.eye(num_nodes, dtype=jnp.float32)   # self-loops
    deg = jnp.sum(adj, axis=1)
    d_inv_sqrt = jnp.where(deg > 0, 1.0 / jnp.sqrt(deg), 0.0)
    return d_inv_sqrt[:, None] * adj * d_inv_sqrt[None, :]


if __name__ == "__main__":
    key = jax.random.PRNGKey(0)
    k_x, k_w1, k_b1, k_w2, k_b2 = jax.random.split(key, 5)

    N = 8
    NFEAT = 16
    HIDDEN = 64
    NCLASS = 4

    x = jax.random.normal(k_x, (N, NFEAT), dtype=jnp.float32)
    w1 = jax.random.uniform(k_w1, (NFEAT, HIDDEN), jnp.float32,
                            -1.0 / NFEAT ** 0.5, 1.0 / NFEAT ** 0.5)
    b1 = jax.random.uniform(k_b1, (HIDDEN,), jnp.float32,
                            -1.0 / NFEAT ** 0.5, 1.0 / NFEAT ** 0.5)
    w2 = jax.random.uniform(k_w2, (HIDDEN, NCLASS), jnp.float32,
                            -1.0 / HIDDEN ** 0.5, 1.0 / HIDDEN ** 0.5)
    b2 = jax.random.uniform(k_b2, (NCLASS,), jnp.float32,
                            -1.0 / HIDDEN ** 0.5, 1.0 / HIDDEN ** 0.5)

    # Small deterministic undirected graph (both edge directions listed).
    undirected = [(0, 1), (1, 2), (2, 3), (3, 4), (4, 5),
                  (5, 6), (6, 7), (7, 0), (0, 4), (2, 6)]
    srcs = [a for a, b in undirected] + [b for a, b in undirected]
    dsts = [b for a, b in undirected] + [a for a, b in undirected]
    edge_index = jnp.array([srcs, dsts], dtype=jnp.int32)   # [2, E]

    a_hat = build_gcn_norm_adj(edge_index, N)

    out = jax.jit(appnp_forward)(x, w1, b1, w2, b2, a_hat)
    jax.block_until_ready(out)

    # Pure-JAX f32 reference.
    h_ref = jnp.maximum(x @ w1 + b1, 0.0)
    z_ref = h_ref @ w2 + b2
    p_ref = z_ref
    for _ in range(K_STEPS):
        p_ref = (1.0 - ALPHA) * (a_hat @ p_ref) + ALPHA * z_ref
    ref = p_ref - jax.scipy.special.logsumexp(p_ref, axis=-1, keepdims=True)

    assert out.shape == (N, NCLASS)
    row_sums = jnp.sum(jnp.exp(out), axis=-1)
    assert jnp.allclose(row_sums, 1.0, atol=1e-4)
    assert jnp.allclose(out, ref, atol=5e-2), float(jnp.max(jnp.abs(out - ref)))

    print("KERNEL_OK")
</pallas_src>

<mosaic_0001>
module attributes {stable_mosaic.version = 11 : i64} {
  func.func @prop_kernel(%arg0: i32, %arg1: i32, %arg2: memref<128x128xbf16, #tpu.memory_space<vmem>>, %arg3: memref<128x128xf32, #tpu.memory_space<vmem>>, %arg4: memref<128x128xf32, #tpu.memory_space<vmem>>, %arg5: memref<128x128xf32, #tpu.memory_space<vmem>>, %arg6: memref<128x128xf32, #tpu.memory_space<vmem>>) attributes {dimension_semantics = [#tpu.dimension_semantics<parallel>, #tpu.dimension_semantics<arbitrary>], iteration_bounds = array<i64: 1, 1>, scalar_prefetch = 0 : i64, scratch_operands = 1 : i64, tpu.core_type = #tpu.core_type<tc>, window_params = [{transform_indices = @transform_0, window_bounds = array<i64: 128, 128>}, {transform_indices = @transform_1, window_bounds = array<i64: 128, 128>}, {transform_indices = @transform_2, window_bounds = array<i64: 128, 128>}, {transform_indices = @transform_3, window_bounds = array<i64: 128, 128>}]} {
    %c0_i32 = arith.constant 0 : i32
    %0 = arith.cmpi eq, %arg1, %c0_i32 : i32
    %1 = arith.extui %0 : i1 to i32
    %c0_i32_0 = arith.constant 0 : i32
    %2 = arith.cmpi ne, %1, %c0_i32_0 : i32
    scf.if %2 {
      %cst_10 = arith.constant 0.000000e+00 : f32
      %13 = vector.broadcast %cst_10 : f32 to vector<128x128xf32>
      %c0_11 = arith.constant 0 : index
      %c0_12 = arith.constant 0 : index
      %14 = vector.load %arg6[%c0_11, %c0_12] : memref<128x128xf32, #tpu.memory_space<vmem>>, vector<128x128xf32>
      tpu.vector_store %arg6[%c0_11, %c0_12], %13 {strides = array<i32>} : memref<128x128xf32, #tpu.memory_space<vmem>>, vector<128x128xf32>,
    } else {
    }
    %c0 = arith.constant 0 : index
    %c0_1 = arith.constant 0 : index
    %3 = vector.load %arg6[%c0, %c0_1] : memref<128x128xf32, #tpu.memory_space<vmem>>, vector<128x128xf32>
    %c0_2 = arith.constant 0 : index
    %c0_3 = arith.constant 0 : index
    %4 = vector.load %arg2[%c0_2, %c0_3] : memref<128x128xbf16, #tpu.memory_space<vmem>>, vector<128x128xbf16>
    %c0_4 = arith.constant 0 : index
    %c0_5 = arith.constant 0 : index
    %5 = vector.load %arg3[%c0_4, %c0_5] : memref<128x128xf32, #tpu.memory_space<vmem>>, vector<128x128xf32>
    %6 = arith.truncf %5 : vector<128x128xf32> to vector<128x128xbf16>
    %cst = arith.constant dense<0.000000e+00> : vector<128x128xf32>
    %7 = tpu.matmul %4, %6, %cst {dimension_numbers = #tpu.dot_dimension_numbers<[1], [0], [0], [1], [0, 0, 1, 1], [], []>} : vector<128x128xbf16>, vector<128x128xbf16>, vector<128x128xf32> -> vector<128x128xf32>
    %8 = arith.addf %3, %7 : vector<128x128xf32>
    %c0_6 = arith.constant 0 : index
    %c0_7 = arith.constant 0 : index
    %9 = vector.load %arg6[%c0_6, %c0_7] : memref<128x128xf32, #tpu.memory_space<vmem>>, vector<128x128xf32>
    tpu.vector_store %arg6[%c0_6, %c0_7], %8 {strides = array<i32>} : memref<128x128xf32, #tpu.memory_space<vmem>>, vector<128x128xf32>,
    %c0_i32_8 = arith.constant 0 : i32
    %10 = arith.cmpi eq, %arg1, %c0_i32_8 : i32
    %11 = arith.extui %10 : i1 to i32
    %c0_i32_9 = arith.constant 0 : i32
    %12 = arith.cmpi ne, %11, %c0_i32_9 : i32
    scf.if %12 {
      %c0_10 = arith.constant 0 : index
      %c0_11 = arith.constant 0 : index
      %13 = vector.load %arg6[%c0_10, %c0_11] : memref<128x128xf32, #tpu.memory_space<vmem>>, vector<128x128xf32>
      %cst_12 = arith.constant 0.899999976 : f32
      %14 = vector.broadcast %cst_12 : f32 to vector<128x128xf32>
      %15 = arith.mulf %14, %13 : vector<128x128xf32>
      %c0_13 = arith.constant 0 : index
      %c0_14 = arith.constant 0 : index
      %16 = vector.load %arg4[%c0_13, %c0_14] : memref<128x128xf32, #tpu.memory_space<vmem>>, vector<128x128xf32>
      %cst_15 = arith.constant 1.000000e-01 : f32
      %17 = vector.broadcast %cst_15 : f32 to vector<128x128xf32>
      %18 = arith.mulf %17, %16 : vector<128x128xf32>
      %19 = arith.addf %15, %18 : vector<128x128xf32>
      %c0_16 = arith.constant 0 : index
      %c0_17 = arith.constant 0 : index
      %20 = vector.load %arg5[%c0_16, %c0_17] : memref<128x128xf32, #tpu.memory_space<vmem>>, vector<128x128xf32>
      tpu.vector_store %arg5[%c0_16, %c0_17], %19 {strides = array<i32>} : memref<128x128xf32, #tpu.memory_space<vmem>>, vector<128x128xf32>,
    } else {
    }
    return
  }
  func.func @transform_0(%arg0: i32, %arg1: i32) -> (i32, i32) {
    %c0_i32 = arith.constant 0 : i32
    return %arg0, %arg1 : i32, i32
  }
  func.func @transform_1(%arg0: i32, %arg1: i32) -> (i32, i32) {
    %c0_i32 = arith.constant 0 : i32
    %c0_i32_0 = arith.constant 0 : i32
    return %arg1, %c0_i32 : i32, i32
  }
  func.func @transform_2(%arg0: i32, %arg1: i32) -> (i32, i32) {
    %c0_i32 = arith.constant 0 : i32
    %c0_i32_0 = arith.constant 0 : i32
    return %arg0, %c0_i32 : i32, i32
  }
  func.func @transform_3(%arg0: i32, %arg1: i32) -> (i32, i32) {
    %c0_i32 = arith.constant 0 : i32
    %c0_i32_0 = arith.constant 0 : i32
    return %arg0, %c0_i32 : i32, i32
  }
}

module attributes {stable_mosaic.version = 11 : i64} {
  func.func @prop_kernel(%arg0: i32, %arg1: i32, %arg2: memref<128x128xbf16, #tpu.memory_space<vmem>>, %arg3: memref<128x128xf32, #tpu.memory_space<vmem>>, %arg4: memref<128x128xf32, #tpu.memory_space<vmem>>, %arg5: memref<128x128xf32, #tpu.memory_space<vmem>>, %arg6: memref<128x128xf32, #tpu.memory_space<vmem>>) attributes {dimension_semantics = [#tpu.dimension_semantics<parallel>, #tpu.dimension_semantics<arbitrary>], iteration_bounds = array<i64: 1, 1>, scalar_prefetch = 0 : i64, scratch_operands = 1 : i64, tpu.core_type = #tpu.core_type<tc>, window_params = [{transform_indices = @transform_0, window_bounds = array<i64: 128, 128>}, {transform_indices = @transform_1, window_bounds = array<i64: 128, 128>}, {transform_indices = @transform_2, window_bounds = array<i64: 128, 128>}, {transform_indices = @transform_3, window_bounds = array<i64: 128, 128>}]} {
    %c0_i32 = arith.constant 0 : i32
    %0 = arith.cmpi eq, %arg1, %c0_i32 : i32
    %1 = arith.extui %0 : i1 to i32
    %c0_i32_0 = arith.constant 0 : i32
    %2 = arith.cmpi ne, %1, %c0_i32_0 : i32
    scf.if %2 {
      %cst_10 = arith.constant 0.000000e+00 : f32
      %13 = vector.broadcast %cst_10 : f32 to vector<128x128xf32>
      %c0_11 = arith.constant 0 : index
      %c0_12 = arith.constant 0 : index
      %14 = vector.load %arg6[%c0_11, %c0_12] : memref<128x128xf32, #tpu.memory_space<vmem>>, vector<128x128xf32>
      tpu.vector_store %arg6[%c0_11, %c0_12], %13 {strides = array<i32>} : memref<128x128xf32, #tpu.memory_space<vmem>>, vector<128x128xf32>,
    } else {
    }
    %c0 = arith.constant 0 : index
    %c0_1 = arith.constant 0 : index
    %3 = vector.load %arg6[%c0, %c0_1] : memref<128x128xf32, #tpu.memory_space<vmem>>, vector<128x128xf32>
    %c0_2 = arith.constant 0 : index
    %c0_3 = arith.constant 0 : index
    %4 = vector.load %arg2[%c0_2, %c0_3] : memref<128x128xbf16, #tpu.memory_space<vmem>>, vector<128x128xbf16>
    %c0_4 = arith.constant 0 : index
    %c0_5 = arith.constant 0 : index
    %5 = vector.load %arg3[%c0_4, %c0_5] : memref<128x128xf32, #tpu.memory_space<vmem>>, vector<128x128xf32>
    %6 = arith.truncf %5 : vector<128x128xf32> to vector<128x128xbf16>
    %cst = arith.constant dense<0.000000e+00> : vector<128x128xf32>
    %7 = tpu.matmul %4, %6, %cst {dimension_numbers = #tpu.dot_dimension_numbers<[1], [0], [0], [1], [0, 0, 1, 1], [], []>} : vector<128x128xbf16>, vector<128x128xbf16>, vector<128x128xf32> -> vector<128x128xf32>
    %8 = arith.addf %3, %7 : vector<128x128xf32>
    %c0_6 = arith.constant 0 : index
    %c0_7 = arith.constant 0 : index
    %9 = vector.load %arg6[%c0_6, %c0_7] : memref<128x128xf32, #tpu.memory_space<vmem>>, vector<128x128xf32>
    tpu.vector_store %arg6[%c0_6, %c0_7], %8 {strides = array<i32>} : memref<128x128xf32, #tpu.memory_space<vmem>>, vector<128x128xf32>,
    %c0_i32_8 = arith.constant 0 : i32
    %10 = arith.cmpi eq, %arg1, %c0_i32_8 : i32
    %11 = arith.extui %10 : i1 to i32
    %c0_i32_9 = arith.constant 0 : i32
    %12 = arith.cmpi ne, %11, %c0_i32_9 : i32
    scf.if %12 {
      %c0_10 = arith.constant 0 : index
      %c0_11 = arith.constant 0 : index
      %13 = vector.load %arg6[%c0_10, %c0_11] : memref<128x128xf32, #tpu.memory_space<vmem>>, vector<128x128xf32>
      %cst_12 = arith.constant 0.899999976 : f32
      %14 = vector.broadcast %cst_12 : f32 to vector<128x128xf32>
      %15 = arith.mulf %14, %13 : vector<128x128xf32>
      %c0_13 = arith.constant 0 : index
      %c0_14 = arith.constant 0 : index
      %16 = vector.load %arg4[%c0_13, %c0_14] : memref<128x128xf32, #tpu.memory_space<vmem>>, vector<128x128xf32>
      %cst_15 = arith.constant 1.000000e-01 : f32
      %17 = vector.broadcast %cst_15 : f32 to vector<128x128xf32>
      %18 = arith.mulf %17, %16 : vector<128x128xf32>
      %19 = arith.addf %15, %18 : vector<128x128xf32>
      %20 = tpu.iota {dimensions = array<i32: 1>} : vector<128x128xi32>
      %c4_i32 = arith.constant 4 : i32
      %21 = vector.broadcast %c4_i32 : i32 to vector<128x128xi32>
      %22 = arith.cmpi slt, %20, %21 : vector<128x128xi32>
      %cst_16 = arith.constant -1.000000e+30 : f32
      %23 = vector.broadcast %cst_16 : f32 to vector<128x128xf32>
      %24 = arith.select %22, %19, %23 : vector<128x128xi1>, vector<128x128xf32>
      %cst_17 = arith.constant dense<0xFF800000> : vector<128xf32>
      %25 = vector.multi_reduction <maximumf>, %24, %cst_17 [1] : vector<128x128xf32> to vector<128xf32>
      %26 = vector.shape_cast %25 : vector<128xf32> to vector<128x1xf32>
      %27 = vector.broadcast %26 : vector<128x1xf32> to vector<128x128xf32>
      %28 = arith.subf %24, %27 : vector<128x128xf32>
      %29 = math.exp %28 : vector<128x128xf32>
      %cst_18 = arith.constant dense<0.000000e+00> : vector<128xf32>
      %30 = vector.multi_reduction <add>, %29, %cst_18 [1] : vector<128x128xf32> to vector<128xf32>
      %31 = vector.shape_cast %30 : vector<128xf32> to vector<128x1xf32>
      %32 = math.log %31 : vector<128x1xf32>
      %33 = vector.broadcast %32 : vector<128x1xf32> to vector<128x128xf32>
      %34 = arith.subf %28, %33 : vector<128x128xf32>
      %c0_19 = arith.constant 0 : index
      %c0_20 = arith.constant 0 : index
      %35 = vector.load %arg5[%c0_19, %c0_20] : memref<128x128xf32, #tpu.memory_space<vmem>>, vector<128x128xf32>
      tpu.vector_store %arg5[%c0_19, %c0_20], %34 {strides = array<i32>} : memref<128x128xf32, #tpu.memory_space<vmem>>, vector<128x128xf32>,
    } else {
    }
    return
  }
  func.func @transform_0(%arg0: i32, %arg1: i32) -> (i32, i32) {
    %c0_i32 = arith.constant 0 : i32
    return %arg0, %arg1 : i32, i32
  }
  func.func @transform_1(%arg0: i32, %arg1: i32) -> (i32, i32) {
    %c0_i32 = arith.constant 0 : i32
    %c0_i32_0 = arith.constant 0 : i32
    return %arg1, %c0_i32 : i32, i32
  }
  func.func @transform_2(%arg0: i32, %arg1: i32) -> (i32, i32) {
    %c0_i32 = arith.constant 0 : i32
    %c0_i32_0 = arith.constant 0 : i32
    return %arg0, %c0_i32 : i32, i32
  }
  func.func @transform_3(%arg0: i32, %arg1: i32) -> (i32, i32) {
    %c0_i32 = arith.constant 0 : i32
    %c0_i32_0 = arith.constant 0 : i32
    return %arg0, %c0_i32 : i32, i32
  }
}

module attributes {stable_mosaic.version = 11 : i64} {
  func.func @mlp_kernel(%arg0: i32, %arg1: memref<128x16xf32, #tpu.memory_space<vmem>>, %arg2: memref<16x64xf32, #tpu.memory_space<vmem>>, %arg3: memref<1x64xf32, #tpu.memory_space<vmem>>, %arg4: memref<64x128xf32, #tpu.memory_space<vmem>>, %arg5: memref<1x128xf32, #tpu.memory_space<vmem>>, %arg6: memref<128x128xf32, #tpu.memory_space<vmem>>) attributes {dimension_semantics = [#tpu.dimension_semantics<parallel>], iteration_bounds = array<i64: 1>, scalar_prefetch = 0 : i64, scratch_operands = 0 : i64, tpu.core_type = #tpu.core_type<tc>, window_params = [{transform_indices = @transform_0, window_bounds = array<i64: 128, 16>}, {pipeline_mode = #tpu.pipeline_mode<synchronous>, transform_indices = @transform_1, window_bounds = array<i64: 16, 64>}, {pipeline_mode = #tpu.pipeline_mode<synchronous>, transform_indices = @transform_2, window_bounds = array<i64: 1, 64>}, {pipeline_mode = #tpu.pipeline_mode<synchronous>, transform_indices = @transform_3, window_bounds = array<i64: 64, 128>}, {pipeline_mode = #tpu.pipeline_mode<synchronous>, transform_indices = @transform_4, window_bounds = array<i64: 1, 128>}, {transform_indices = @transform_5, window_bounds = array<i64: 128, 128>}]} {
    %c0 = arith.constant 0 : index
    %c0_0 = arith.constant 0 : index
    %0 = vector.load %arg1[%c0, %c0_0] : memref<128x16xf32, #tpu.memory_space<vmem>>, vector<128x16xf32>
    %c0_1 = arith.constant 0 : index
    %c0_2 = arith.constant 0 : index
    %1 = vector.load %arg2[%c0_1, %c0_2] : memref<16x64xf32, #tpu.memory_space<vmem>>, vector<16x64xf32>
    %cst = arith.constant dense<0.000000e+00> : vector<128x64xf32>
    %2 = tpu.matmul %0, %1, %cst {dimension_numbers = #tpu.dot_dimension_numbers<[1], [0], [0], [1], [0, 0, 1, 1], [], []>} : vector<128x16xf32>, vector<16x64xf32>, vector<128x64xf32> -> vector<128x64xf32>
    %c0_3 = arith.constant 0 : index
    %c0_4 = arith.constant 0 : index
    %3 = vector.load %arg3[%c0_3, %c0_4] : memref<1x64xf32, #tpu.memory_space<vmem>>, vector<1x64xf32>
    %4 = vector.broadcast %3 : vector<1x64xf32> to vector<128x64xf32>
    %5 = arith.addf %2, %4 : vector<128x64xf32>
    %cst_5 = arith.constant 0.000000e+00 : f32
    %6 = vector.broadcast %cst_5 : f32 to vector<128x64xf32>
    %7 = arith.maximumf %5, %6 : vector<128x64xf32>
    %c0_6 = arith.constant 0 : index
    %c0_7 = arith.constant 0 : index
    %8 = vector.load %arg4[%c0_6, %c0_7] : memref<64x128xf32, #tpu.memory_space<vmem>>, vector<64x128xf32>
    %cst_8 = arith.constant dense<0.000000e+00> : vector<128x128xf32>
    %9 = tpu.matmul %7, %8, %cst_8 {dimension_numbers = #tpu.dot_dimension_numbers<[1], [0], [0], [1], [0, 0, 1, 1], [], []>} : vector<128x64xf32>, vector<64x128xf32>, vector<128x128xf32> -> vector<128x128xf32>
    %c0_9 = arith.constant 0 : index
    %c0_10 = arith.constant 0 : index
    %10 = vector.load %arg5[%c0_9, %c0_10] : memref<1x128xf32, #tpu.memory_space<vmem>>, vector<1x128xf32>
    %11 = vector.broadcast %10 : vector<1x128xf32> to vector<128x128xf32>
    %12 = arith.addf %9, %11 : vector<128x128xf32>
    %c0_11 = arith.constant 0 : index
    %c0_12 = arith.constant 0 : index
    %13 = vector.load %arg6[%c0_11, %c0_12] : memref<128x128xf32, #tpu.memory_space<vmem>>, vector<128x128xf32>
    tpu.vector_store %arg6[%c0_11, %c0_12], %12 {strides = array<i32>} : memref<128x128xf32, #tpu.memory_space<vmem>>, vector<128x128xf32>,
    return
  }
  func.func @transform_0(%arg0: i32) -> (i32, i32) {
    %c0_i32 = arith.constant 0 : i32
    %c0_i32_0 = arith.constant 0 : i32
    return %arg0, %c0_i32 : i32, i32
  }
  func.func @transform_1(%arg0: i32) -> (i32, i32) {
    %c0_i32 = arith.constant 0 : i32
    %c0_i32_0 = arith.constant 0 : i32
    %c0_i32_1 = arith.constant 0 : i32
    return %c0_i32, %c0_i32_0 : i32, i32
  }
  func.func @transform_2(%arg0: i32) -> (i32, i32) {
    %c0_i32 = arith.constant 0 : i32
    %c0_i32_0 = arith.constant 0 : i32
    %c0_i32_1 = arith.constant 0 : i32
    return %c0_i32, %c0_i32_0 : i32, i32
  }
  func.func @transform_3(%arg0: i32) -> (i32, i32) {
    %c0_i32 = arith.constant 0 : i32
    %c0_i32_0 = arith.constant 0 : i32
    %c0_i32_1 = arith.constant 0 : i32
    return %c0_i32, %c0_i32_0 : i32, i32
  }
  func.func @transform_4(%arg0: i32) -> (i32, i32) {
    %c0_i32 = arith.constant 0 : i32
    %c0_i32_0 = arith.constant 0 : i32
    %c0_i32_1 = arith.constant 0 : i32
    return %c0_i32, %c0_i32_0 : i32, i32
  }
  func.func @transform_5(%arg0: i32) -> (i32, i32) {
    %c0_i32 = arith.constant 0 : i32
    %c0_i32_0 = arith.constant 0 : i32
    return %arg0, %c0_i32 : i32, i32
  }
}

</mosaic_0001>

<llo_original>
// kernel: appnp_forward.6
$region0: #{appnp_forward.6}
  #allocation0 [shape = 'u32[]', space=smem, size = 0x4, offset = 0x4, fixed_abs, tag = 'smem constant byte address 0x4 - core index']
  #allocation1 [shape = 'u32[144,128]{1,0:T(1,128)}', space=vmem, size = 0x12000, scoped, tag = 'internal scratch']
  %s0 = inlined_call_operand.vmem [shape: f32[128,16], index: 0, kind: input, shape index: {}]
  %s1 = inlined_call_operand.vmem [shape: f32[16,64], index: 1, kind: input, shape index: {}]
  %s2 = inlined_call_operand.vmem [shape: f32[1,64], index: 2, kind: input, shape index: {}]
  %s3 = inlined_call_operand.vmem [shape: f32[64,128], index: 3, kind: input, shape index: {}]
  %s4 = inlined_call_operand.vmem [shape: f32[1,128], index: 4, kind: input, shape index: {}]
  %s5 = inlined_call_operand.vmem [shape: f32[128,128], index: 5, kind: output, shape index: {}]
  %s6 = sld [smem:[#allocation0]]
  $region30: #{appnp_forward.6} parent=0
    _
  %s8 = ssub.s32 1, %s6
  %s9 = scalar_select 0, %s8, %s6
  // Predicated region
  $region2: #{appnp_forward.6} parent=0 // pred_check
    _
  $region3: #{appnp_forward.6} parent=0 // pred_check_branch
    %11 = sbr.rel (0) target = $region5
  $region4: #{appnp_forward.6} parent=0 // pred_region
    _
  $region5: #{appnp_forward.6} parent=0 // pred_fallthru
    _
  // Predicated region
  $region6: #{appnp_forward.6} parent=0 // pred_check
    _
  $region7: #{appnp_forward.6} parent=0 // pred_check_branch
    %13 = sbr.rel (0) target = $region9
  $region8: #{appnp_forward.6} parent=0 // pred_region
    _
  $region9: #{appnp_forward.6} parent=0 // pred_fallthru
    _
  // Predicated region
  $region10: #{appnp_forward.6} parent=0 // pred_check
    _
  $region11: #{appnp_forward.6} parent=0 // pred_check_branch
    %15 = sbr.rel (0) target = $region13
  $region12: #{appnp_forward.6} parent=0 // pred_region
    _
  $region13: #{appnp_forward.6} parent=0 // pred_fallthru
    _
  // Predicated region
  $region14: #{appnp_forward.6} parent=0 // pred_check
    _
  $region15: #{appnp_forward.6} parent=0 // pred_check_branch
    %17 = sbr.rel (0) target = $region17
  $region16: #{appnp_forward.6} parent=0 // pred_region
    _
  $region17: #{appnp_forward.6} parent=0 // pred_fallthru
    _
  // Predicated region
  $region18: #{appnp_forward.6} parent=0 // pred_check
    _
  $region19: #{appnp_forward.6} parent=0 // pred_check_branch
    %19 = sbr.rel (0) target = $region21
  $region20: #{appnp_forward.6} parent=0 // pred_region
    _
  $region21: #{appnp_forward.6} parent=0 // pred_fallthru
    _
  %v20 = vld [vmem:[%s0] sm:$0xff]
  %v21 = vld [vmem:[%s0 + $0x8] sm:$0xff]
  %v22 = vld [vmem:[%s0 + $0x10] sm:$0xff]
  %v23 = vld [vmem:[%s0 + $0x18] sm:$0xff]
  %v24 = vld [vmem:[%s0 + $0x20] sm:$0xff]
  %v25 = vld [vmem:[%s0 + $0x28] sm:$0xff]
  %v26 = vld [vmem:[%s0 + $0x30] sm:$0xff]
  %v27 = vld [vmem:[%s0 + $0x38] sm:$0xff]
  %v28 = vld [vmem:[%s0 + $0x40] sm:$0xff]
  %v29 = vld [vmem:[%s0 + $0x48] sm:$0xff]
  %v30 = vld [vmem:[%s0 + $0x50] sm:$0xff]
  %v31 = vld [vmem:[%s0 + $0x58] sm:$0xff]
  %v32 = vld [vmem:[%s0 + $0x60] sm:$0xff]
  %v33 = vld [vmem:[%s0 + $0x68] sm:$0xff]
  %v34 = vld [vmem:[%s0 + $0x70] sm:$0xff]
  %v35 = vld [vmem:[%s0 + $0x78] sm:$0xff]
  %v36 = vld [vmem:[%s1] sm:$0xff]
  %v37 = vld [vmem:[%s1 + $0x8] sm:$0xff]
  %v38 = vld [vmem:[%s2] sm:$0x1]
  %v40 = vlaneseq
  %v41 = vshrl.u32 %v40, 7
  %v42 = vsub.s32 0, %v41
  %v43 = vrot.slane %v38, %v42
  %vm45 = vcmask 130048
  %v47 = vsel %vm45, %v20, 0
  %v50 = vsel %vm45, %v21, 0
  %v53 = vsel %vm45, %v22, 0
  %v56 = vsel %vm45, %v23, 0
  %v59 = vsel %vm45, %v24, 0
  %v62 = vsel %vm45, %v25, 0
  %v65 = vsel %vm45, %v26, 0
  %v68 = vsel %vm45, %v27, 0
  %v71 = vsel %vm45, %v28, 0
  %v74 = vsel %vm45, %v29, 0
  %v77 = vsel %vm45, %v30, 0
  %v80 = vsel %vm45, %v31, 0
  %v83 = vsel %vm45, %v32, 0
  %v86 = vsel %vm45, %v33, 0
  %v89 = vsel %vm45, %v34, 0
  %v92 = vsel %vm45, %v35, 0
  %94 = vmatprep.subr.mxu0 0.0
  %95 = vmatpush1.msra.mxu0 %v36
  %96 = vmatprep.subr.mxu0 0.0
  %97 = vmatpush1.msra.mxu0 %v37
  %98 = vmatprep.subr.mxu0 0.0
  %99 = vmatpush1.msra.mxu0 0.0
  %100 = vmatprep.subr.mxu0 0.0
  %101 = vmatpush1.msra.mxu0 0.0
  %102 = vmatprep.subr.mxu0 0.0
  %103 = vmatpush1.msra.mxu0 0.0
  %104 = vmatprep.subr.mxu0 0.0
  %105 = vmatpush1.msra.mxu0 0.0
  %106 = vmatprep.subr.mxu0 0.0
  %107 = vmatpush1.msra.mxu0 0.0
  %108 = vmatprep.subr.mxu0 0.0
  %109 = vmatpush1.msra.mxu0 0.0
  %110 = vmatprep.subr.mxu0 0.0
  %111 = vmatpush1.msra.mxu0 0.0
  %112 = vmatprep.subr.mxu0 0.0
  %113 = vmatpush1.msra.mxu0 0.0
  %114 = vmatprep.subr.mxu0 0.0
  %115 = vmatpush1.msra.mxu0 0.0
  %116 = vmatprep.subr.mxu0 0.0
  %117 = vmatpush1.msra.mxu0 0.0
  %118 = vmatprep.subr.mxu0 0.0
  %119 = vmatpush1.msra.mxu0 0.0
  %120 = vmatprep.subr.mxu0 0.0
  %121 = vmatpush1.msra.mxu0 0.0
  %122 = vmatprep.subr.mxu0 0.0
  %123 = vmatpush1.msra.mxu0 0.0
  %124 = vmatprep.subr.mxu0 0.0
  %125 = vmatpush1.msra.mxu0 0.0
  %126 = vmatprep.subr.mxu0 0.0
  %127 = vmatpush1.msra.mxu0 0.0
  %128 = vmatprep.subr.mxu0 0.0
  %129 = vmatpush1.msra.mxu0 0.0
  %130 = vmatprep.subr.mxu0 0.0
  %131 = vmatpush1.msra.mxu0 0.0
  %132 = vmatprep.subr.mxu0 0.0
  %133 = vmatpush1.msra.mxu0 0.0
  %134 = vmatprep.subr.mxu0 0.0
  %135 = vmatpush1.msra.mxu0 0.0
  %136 = vmatprep.subr.mxu0 0.0
  %137 = vmatpush1.msra.mxu0 0.0
  %138 = vmatprep.subr.mxu0 0.0
  %139 = vmatpush1.msra.mxu0 0.0
  %140 = vmatprep.subr.mxu0 0.0
  %141 = vmatpush1.msra.mxu0 0.0
  %142 = vmatprep.subr.mxu0 0.0
  %143 = vmatpush1.msra.mxu0 0.0
  %144 = vmatprep.subr.mxu0 0.0
  %145 = vmatpush1.msra.mxu0 0.0
  %146 = vmatprep.subr.mxu0 0.0
  %147 = vmatpush1.msra.mxu0 0.0
  %148 = vmatprep.subr.mxu0 0.0
  %149 = vmatpush1.msra.mxu0 0.0
  %150 = vmatprep.subr.mxu0 0.0
  %151 = vmatpush1.msra.mxu0 0.0
  %152 = vmatprep.subr.mxu0 0.0
  %153 = vmatpush1.msra.mxu0 0.0
  %154 = vmatprep.subr.mxu0 0.0
  %155 = vmatpush1.msra.mxu0 0.0
  %156 = vmatprep.subr.mxu0 0.0
  %157 = vmatpush1.msra.mxu0 0.0
  %158 = vmatprep.mubr.f32.mxu0 0.0
  %159 = vmatmul.mubr.f32.gmra.mrb[0].mxu0 %v47
  %v160 = vpop.f32.mrb[0].mxu0
  %v161 = vadd.f32 %v43, %v160
  %v162 = vpop.f32.mrb[0].mxu0
  %163 = vmatprep.mubr.f32.mxu0 0.0
  %164 = vmatmul.mubr.f32.gmra.mrb[0].mxu0 %v50
  %v165 = vpop.f32.mrb[0].mxu0
  %v166 = vadd.f32 %v43, %v165
  %v167 = vpop.f32.mrb[0].mxu0
  %168 = vmatprep.mubr.f32.mxu0 0.0
  %169 = vmatmul.mubr.f32.gmra.mrb[0].mxu0 %v53
  %v170 = vpop.f32.mrb[0].mxu0
  %v171 = vadd.f32 %v43, %v170
  %v172 = vpop.f32.mrb[0].mxu0
  %173 = vmatprep.mubr.f32.mxu0 0.0
  %174 = vmatmul.mubr.f32.gmra.mrb[0].mxu0 %v56
  %v175 = vpop.f32.mrb[0].mxu0
  %v176 = vadd.f32 %v43, %v175
  %v177 = vpop.f32.mrb[0].mxu0
  %178 = vmatprep.mubr.f32.mxu0 0.0
  %179 = vmatmul.mubr.f32.gmra.mrb[0].mxu0 %v59
  %v180 = vpop.f32.mrb[0].mxu0
  %v181 = vadd.f32 %v43, %v180
  %v182 = vpop.f32.mrb[0].mxu0
  %183 = vmatprep.mubr.f32.mxu0 0.0
  %184 = vmatmul.mubr.f32.gmra.mrb[0].mxu0 %v62
  %v185 = vpop.f32.mrb[0].mxu0
  %v186 = vadd.f32 %v43, %v185
  %v187 = vpop.f32.mrb[0].mxu0
  %188 = vmatprep.mubr.f32.mxu0 0.0
  %189 = vmatmul.mubr.f32.gmra.mrb[0].mxu0 %v65
  %v190 = vpop.f32.mrb[0].mxu0
  %v191 = vadd.f32 %v43, %v190
  %v192 = vpop.f32.mrb[0].mxu0
  %193 = vmatprep.mubr.f32.mxu0 0.0
  %194 = vmatmul.mubr.f32.gmra.mrb[0].mxu0 %v68
  %v195 = vpop.f32.mrb[0].mxu0
  %v196 = vadd.f32 %v43, %v195
  %v197 = vpop.f32.mrb[0].mxu0
  %198 = vmatprep.mubr.f32.mxu0 0.0
  %199 = vmatmul.mubr.f32.gmra.mrb[0].mxu0 %v71
  %v200 = vpop.f32.mrb[0].mxu0
  %v201 = vadd.f32 %v43, %v200
  %v202 = vpop.f32.mrb[0].mxu0
  %203 = vmatprep.mubr.f32.mxu0 0.0
  %204 = vmatmul.mubr.f32.gmra.mrb[0].mxu0 %v74
  %v205 = vpop.f32.mrb[0].mxu0
  %v206 = vadd.f32 %v43, %v205
  %v207 = vpop.f32.mrb[0].mxu0
  %208 = vmatprep.mubr.f32.mxu0 0.0
  %209 = vmatmul.mubr.f32.gmra.mrb[0].mxu0 %v77
  %v210 = vpop.f32.mrb[0].mxu0
  %v211 = vadd.f32 %v43, %v210
  %v212 = vpop.f32.mrb[0].mxu0
  %213 = vmatprep.mubr.f32.mxu0 0.0
  %214 = vmatmul.mubr.f32.gmra.mrb[0].mxu0 %v80
  %v215 = vpop.f32.mrb[0].mxu0
  %v216 = vadd.f32 %v43, %v215
  %v217 = vpop.f32.mrb[0].mxu0
  %218 = vmatprep.mubr.f32.mxu0 0.0
  %219 = vmatmul.mubr.f32.gmra.mrb[0].mxu0 %v83
  %v220 = vpop.f32.mrb[0].mxu0
  %v221 = vadd.f32 %v43, %v220
  %v222 = vpop.f32.mrb[0].mxu0
  %223 = vmatprep.mubr.f32.mxu0 0.0
  %224 = vmatmul.mubr.f32.gmra.mrb[0].mxu0 %v86
  %v225 = vpop.f32.mrb[0].mxu0
  %v226 = vadd.f32 %v43, %v225
  %v227 = vpop.f32.mrb[0].mxu0
  %228 = vmatprep.mubr.f32.mxu0 0.0
  %229 = vmatmul.mubr.f32.gmra.mrb[0].mxu0 %v89
  %v230 = vpop.f32.mrb[0].mxu0
  %v231 = vadd.f32 %v43, %v230
  %v232 = vpop.f32.mrb[0].mxu0
  %233 = vmatprep.mubr.f32.mxu0 0.0
  %234 = vmatmul.mubr.f32.gmra.mrb[0].mxu0 %v92
  %v235 = vpop.f32.mrb[0].mxu0
  %v236 = vadd.f32 %v43, %v235
  %v237 = vpop.f32.mrb[0].mxu0
  %238 = vdwg.mxu0
  %v239 = vmax.f32 %v161, 0.0
  %v240 = vmax.f32 %v166, 0.0
  %v241 = vmax.f32 %v171, 0.0
  %v242 = vmax.f32 %v176, 0.0
  %v243 = vmax.f32 %v181, 0.0
  %v244 = vmax.f32 %v186, 0.0
  %v245 = vmax.f32 %v191, 0.0
  %v246 = vmax.f32 %v196, 0.0
  %v247 = vmax.f32 %v201, 0.0
  %v248 = vmax.f32 %v206, 0.0
  %v249 = vmax.f32 %v211, 0.0
  %v250 = vmax.f32 %v216, 0.0
  %v251 = vmax.f32 %v221, 0.0
  %v252 = vmax.f32 %v226, 0.0
  %v253 = vmax.f32 %v231, 0.0
  %v254 = vmax.f32 %v236, 0.0
  %v255 = vld [vmem:[%s3] sm:$0xff]
  %v256 = vld [vmem:[%s3 + $0x8] sm:$0xff]
  %v257 = vld [vmem:[%s3 + $0x10] sm:$0xff]
  %v258 = vld [vmem:[%s3 + $0x18] sm:$0xff]
  %v259 = vld [vmem:[%s3 + $0x20] sm:$0xff]
  %v260 = vld [vmem:[%s3 + $0x28] sm:$0xff]
  %v261 = vld [vmem:[%s3 + $0x30] sm:$0xff]
  %v262 = vld [vmem:[%s3 + $0x38] sm:$0xff]
  %v263 = vld [vmem:[%s4] sm:$0x1]
  %v265 = vlaneseq
  %v266 = vshrl.u32 %v265, 7
  %v267 = vsub.s32 0, %v266
  %v268 = vrot.slane %v263, %v267
  %vm270 = vcmask 523264
  %v272 = vsel %vm270, %v239, 0
  %v275 = vsel %vm270, %v240, 0
  %v278 = vsel %vm270, %v241, 0
  %v281 = vsel %vm270, %v242, 0
  %v284 = vsel %vm270, %v243, 0
  %v287 = vsel %vm270, %v244, 0
  %v290 = vsel %vm270, %v245, 0
  %v293 = vsel %vm270, %v246, 0
  %v296 = vsel %vm270, %v247, 0
  %v299 = vsel %vm270, %v248, 0
  %v302 = vsel %vm270, %v249, 0
  %v305 = vsel %vm270, %v250, 0
  %v308 = vsel %vm270, %v251, 0
  %v311 = vsel %vm270, %v252, 0
  %v314 = vsel %vm270, %v253, 0
  %v317 = vsel %vm270, %v254, 0
  %319 = vmatprep.subr.mxu0 0.0
  %320 = vmatpush1.msra.mxu0 %v255
  %321 = vmatprep.subr.mxu0 0.0
  %322 = vmatpush1.msra.mxu0 %v256
  %323 = vmatprep.subr.mxu0 0.0
  %324 = vmatpush1.msra.mxu0 %v257
  %325 = vmatprep.subr.mxu0 0.0
  %326 = vmatpush1.msra.mxu0 %v258
  %327 = vmatprep.subr.mxu0 0.0
  %328 = vmatpush1.msra.mxu0 %v259
  %329 = vmatprep.subr.mxu0 0.0
  %330 = vmatpush1.msra.mxu0 %v260
  %331 = vmatprep.subr.mxu0 0.0
  %332 = vmatpush1.msra.mxu0 %v261
  %333 = vmatprep.subr.mxu0 0.0
  %334 = vmatpush1.msra.mxu0 %v262
  %335 = vmatprep.subr.mxu0 0.0
  %336 = vmatpush1.msra.mxu0 0.0
  %337 = vmatprep.subr.mxu0 0.0
  %338 = vmatpush1.msra.mxu0 0.0
  %339 = vmatprep.subr.mxu0 0.0
  %340 = vmatpush1.msra.mxu0 0.0
  %341 = vmatprep.subr.mxu0 0.0
  %342 = vmatpush1.msra.mxu0 0.0
  %343 = vmatprep.subr.mxu0 0.0
  %344 = vmatpush1.msra.mxu0 0.0
  %345 = vmatprep.subr.mxu0 0.0
  %346 = vmatpush1.msra.mxu0 0.0
  %347 = vmatprep.subr.mxu0 0.0
  %348 = vmatpush1.msra.mxu0 0.0
  %349 = vmatprep.subr.mxu0 0.0
  %350 = vmatpush1.msra.mxu0 0.0
  %351 = vmatprep.subr.mxu0 0.0
  %352 = vmatpush1.msra.mxu0 0.0
  %353 = vmatprep.subr.mxu0 0.0
  %354 = vmatpush1.msra.mxu0 0.0
  %355 = vmatprep.subr.mxu0 0.0
  %356 = vmatpush1.msra.mxu0 0.0
  %357 = vmatprep.subr.mxu0 0.0
  %358 = vmatpush1.msra.mxu0 0.0
  %359 = vmatprep.subr.mxu0 0.0
  %360 = vmatpush1.msra.mxu0 0.0
  %361 = vmatprep.subr.mxu0 0.0
  %362 = vmatpush1.msra.mxu0 0.0
  %363 = vmatprep.subr.mxu0 0.0
  %364 = vmatpush1.msra.mxu0 0.0
  %365 = vmatprep.subr.mxu0 0.0
  %366 = vmatpush1.msra.mxu0 0.0
  %367 = vmatprep.subr.mxu0 0.0
  %368 = vmatpush1.msra.mxu0 0.0
  %369 = vmatprep.subr.mxu0 0.0
  %370 = vmatpush1.msra.mxu0 0.0
  %371 = vmatprep.subr.mxu0 0.0
  %372 = vmatpush1.msra.mxu0 0.0
  %373 = vmatprep.subr.mxu0 0.0
  %374 = vmatpush1.msra.mxu0 0.0
  %375 = vmatprep.subr.mxu0 0.0
  %376 = vmatpush1.msra.mxu0 0.0
  %377 = vmatprep.subr.mxu0 0.0
  %378 = vmatpush1.msra.mxu0 0.0
  %379 = vmatprep.subr.mxu0 0.0
  %380 = vmatpush1.msra.mxu0 0.0
  %381 = vmatprep.subr.mxu0 0.0
  %382 = vmatpush1.msra.mxu0 0.0
  %383 = vmatprep.mubr.f32.mxu0 0.0
  %384 = vmatmul.mubr.f32.gmra.mrb[0].mxu0 %v272
  %v385 = vpop.f32.mrb[0].mxu0
  %v386 = vadd.f32 %v268, %v385
  %v387 = vpop.f32.mrb[0].mxu0
  %388 = vmatprep.mubr.f32.mxu0 0.0
  %389 = vmatmul.mubr.f32.gmra.mrb[0].mxu0 %v275
  %v390 = vpop.f32.mrb[0].mxu0
  %v391 = vadd.f32 %v268, %v390
  %v392 = vpop.f32.mrb[0].mxu0
  %393 = vmatprep.mubr.f32.mxu0 0.0
  %394 = vmatmul.mubr.f32.gmra.mrb[0].mxu0 %v278
  %v395 = vpop.f32.mrb[0].mxu0
  %v396 = vadd.f32 %v268, %v395
  %v397 = vpop.f32.mrb[0].mxu0
  %398 = vmatprep.mubr.f32.mxu0 0.0
  %399 = vmatmul.mubr.f32.gmra.mrb[0].mxu0 %v281
  %v400 = vpop.f32.mrb[0].mxu0
  %v401 = vadd.f32 %v268, %v400
  %v402 = vpop.f32.mrb[0].mxu0
  %403 = vmatprep.mubr.f32.mxu0 0.0
  %404 = vmatmul.mubr.f32.gmra.mrb[0].mxu0 %v284
  %v405 = vpop.f32.mrb[0].mxu0
  %v406 = vadd.f32 %v268, %v405
  %v407 = vpop.f32.mrb[0].mxu0
  %408 = vmatprep.mubr.f32.mxu0 0.0
  %409 = vmatmul.mubr.f32.gmra.mrb[0].mxu0 %v287
  %v410 = vpop.f32.mrb[0].mxu0
  %v411 = vadd.f32 %v268, %v410
  %v412 = vpop.f32.mrb[0].mxu0
  %413 = vmatprep.mubr.f32.mxu0 0.0
  %414 = vmatmul.mubr.f32.gmra.mrb[0].mxu0 %v290
  %v415 = vpop.f32.mrb[0].mxu0
  %v416 = vadd.f32 %v268, %v415
  %v417 = vpop.f32.mrb[0].mxu0
  %418 = vmatprep.mubr.f32.mxu0 0.0
  %419 = vmatmul.mubr.f32.gmra.mrb[0].mxu0 %v293
  %v420 = vpop.f32.mrb[0].mxu0
  %v421 = vadd.f32 %v268, %v420
  %v422 = vpop.f32.mrb[0].mxu0
  %423 = vmatprep.mubr.f32.mxu0 0.0
  %424 = vmatmul.mubr.f32.gmra.mrb[0].mxu0 %v296
  %v425 = vpop.f32.mrb[0].mxu0
  %v426 = vadd.f32 %v268, %v425
  %v427 = vpop.f32.mrb[0].mxu0
  %428 = vmatprep.mubr.f32.mxu0 0.0
  %429 = vmatmul.mubr.f32.gmra.mrb[0].mxu0 %v299
  %v430 = vpop.f32.mrb[0].mxu0
  %v431 = vadd.f32 %v268, %v430
  %v432 = vpop.f32.mrb[0].mxu0
  %433 = vmatprep.mubr.f32.mxu0 0.0
  %434 = vmatmul.mubr.f32.gmra.mrb[0].mxu0 %v302
  %v435 = vpop.f32.mrb[0].mxu0
  %v436 = vadd.f32 %v268, %v435
  %v437 = vpop.f32.mrb[0].mxu0
  %438 = vmatprep.mubr.f32.mxu0 0.0
  %439 = vmatmul.mubr.f32.gmra.mrb[0].mxu0 %v305
  %v440 = vpop.f32.mrb[0].mxu0
  %v441 = vadd.f32 %v268, %v440
  %v442 = vpop.f32.mrb[0].mxu0
  %443 = vmatprep.mubr.f32.mxu0 0.0
  %444 = vmatmul.mubr.f32.gmra.mrb[0].mxu0 %v308
  %v445 = vpop.f32.mrb[0].mxu0
  %v446 = vadd.f32 %v268, %v445
  %v447 = vpop.f32.mrb[0].mxu0
  %448 = vmatprep.mubr.f32.mxu0 0.0
  %449 = vmatmul.mubr.f32.gmra.mrb[0].mxu0 %v311
  %v450 = vpop.f32.mrb[0].mxu0
  %v451 = vadd.f32 %v268, %v450
  %v452 = vpop.f32.mrb[0].mxu0
  %453 = vmatprep.mubr.f32.mxu0 0.0
  %454 = vmatmul.mubr.f32.gmra.mrb[0].mxu0 %v314
  %v455 = vpop.f32.mrb[0].mxu0
  %v456 = vadd.f32 %v268, %v455
  %v457 = vpop.f32.mrb[0].mxu0
  %458 = vmatprep.mubr.f32.mxu0 0.0
  %459 = vmatmul.mubr.f32.gmra.mrb[0].mxu0 %v317
  %v460 = vpop.f32.mrb[0].mxu0
  %v461 = vadd.f32 %v268, %v460
  %v462 = vpop.f32.mrb[0].mxu0
  %463 = vdwg.mxu0
  %464 = vst [vmem:[%s5] sm:$0xff] %v386
  %465 = vst [vmem:[%s5 + $0x8] sm:$0xff] %v391
  %466 = vst [vmem:[%s5 + $0x10] sm:$0xff] %v396
  %467 = vst [vmem:[%s5 + $0x18] sm:$0xff] %v401
  %468 = vst [vmem:[%s5 + $0x20] sm:$0xff] %v406
  %469 = vst [vmem:[%s5 + $0x28] sm:$0xff] %v411
  %470 = vst [vmem:[%s5 + $0x30] sm:$0xff] %v416
  %471 = vst [vmem:[%s5 + $0x38] sm:$0xff] %v421
  %472 = vst [vmem:[%s5 + $0x40] sm:$0xff] %v426
  %473 = vst [vmem:[%s5 + $0x48] sm:$0xff] %v431
  %474 = vst [vmem:[%s5 + $0x50] sm:$0xff] %v436
  %475 = vst [vmem:[%s5 + $0x58] sm:$0xff] %v441
  %476 = vst [vmem:[%s5 + $0x60] sm:$0xff] %v446
  %477 = vst [vmem:[%s5 + $0x68] sm:$0xff] %v451
  %478 = vst [vmem:[%s5 + $0x70] sm:$0xff] %v456
  %479 = vst [vmem:[%s5 + $0x78] sm:$0xff] %v461
  // Predicated region
  $region22: #{appnp_forward.6} parent=0 // pred_check
    _
  $region23: #{appnp_forward.6} parent=0 // pred_check_branch
    %481 = sbr.rel (0) target = $region25
  $region24: #{appnp_forward.6} parent=0 // pred_region
    _
  $region25: #{appnp_forward.6} parent=0 // pred_fallthru
    _
  // Predicated region
  $region26: #{appnp_forward.6} parent=0 // pred_check
    _
  $region27: #{appnp_forward.6} parent=0 // pred_check_branch
    %483 = sbr.rel (0) target = $region29
  $region28: #{appnp_forward.6} parent=0 // pred_region
    _
  $region29: #{appnp_forward.6} parent=0 // pred_fallthru
    _

// kernel: appnp_forward.7
$region0: #{appnp_forward.7}
  #allocation0 [shape = 'u32[]', space=smem, size = 0x4, offset = 0x4, fixed_abs, tag = 'smem constant byte address 0x4 - core index']
  #allocation1 [shape = 'u32[144,128]{1,0:T(1,128)}', space=vmem, size = 0x12000, scoped, tag = 'internal scratch']
  #allocation2 [shape = 'f32[128,128]{1,0:T(8,128)}', space=vmem, size = 0x10000, scoped, tag = 'scratch operand']
  %s0 = inlined_call_operand.vmem [shape: bf16[128,128], index: 0, kind: input, shape index: {}]
  %s1 = inlined_call_operand.vmem [shape: f32[128,128], index: 1, kind: input, shape index: {}, may-alias: {1,2}]
  %s2 = inlined_call_operand.vmem [shape: f32[128,128], index: 2, kind: input, shape index: {}, may-alias: {1,2}]
  %s3 = inlined_call_operand.vmem [shape: f32[128,128], index: 3, kind: output, shape index: {}]
  %s4 = sld [smem:[#allocation0]]
  $region30: #{appnp_forward.7} parent=0
    _
  %s6 = ssub.s32 1, %s4
  %s7 = scalar_select 0, %s6, %s4
  // Predicated region
  $region2: #{appnp_forward.7} parent=0 // pred_check
    _
  $region3: #{appnp_forward.7} parent=0 // pred_check_branch
    %9 = sbr.rel (0) target = $region5
  $region4: #{appnp_forward.7} parent=0 // pred_region
    _
  $region5: #{appnp_forward.7} parent=0 // pred_fallthru
    _
  // Predicated region
  $region6: #{appnp_forward.7} parent=0 // pred_check
    _
  $region7: #{appnp_forward.7} parent=0 // pred_check_branch
    %11 = sbr.rel (0) target = $region9
  $region8: #{appnp_forward.7} parent=0 // pred_region
    _
  $region9: #{appnp_forward.7} parent=0 // pred_fallthru
    _
  // Predicated region
  $region10: #{appnp_forward.7} parent=0 // pred_check
    _
  $region11: #{appnp_forward.7} parent=0 // pred_check_branch
    %13 = sbr.rel (0) target = $region13
  $region12: #{appnp_forward.7} parent=0 // pred_region
    _
  $region13: #{appnp_forward.7} parent=0 // pred_fallthru
    _
  %p15 = scmp.eq.s32.totalorder 0, 0
  // Predicated region
  $region14: #{appnp_forward.7} parent=0 // pred_check
    %p16 = pneg %p15
  $region15: #{appnp_forward.7} parent=0 // pred_check_branch
    %18 = sbr.rel (%p16) target = $region17
  $region16: #{appnp_forward.7} parent=0 // pred_region
    %19 = vst [vmem:[#allocation2] sm:$0xff] 0.0
    %20 = vst [vmem:[#allocation2 + $0x8] sm:$0xff] 0.0
    %21 = vst [vmem:[#allocation2 + $0x10] sm:$0xff] 0.0
    %22 = vst [vmem:[#allocation2 + $0x18] sm:$0xff] 0.0
    %23 = vst [vmem:[#allocation2 + $0x20] sm:$0xff] 0.0
    %24 = vst [vmem:[#allocation2 + $0x28] sm:$0xff] 0.0
    %25 = vst [vmem:[#allocation2 + $0x30] sm:$0xff] 0.0
    %26 = vst [vmem:[#allocation2 + $0x38] sm:$0xff] 0.0
    %27 = vst [vmem:[#allocation2 + $0x40] sm:$0xff] 0.0
    %28 = vst [vmem:[#allocation2 + $0x48] sm:$0xff] 0.0
    %29 = vst [vmem:[#allocation2 + $0x50] sm:$0xff] 0.0
    %30 = vst [vmem:[#allocation2 + $0x58] sm:$0xff] 0.0
    %31 = vst [vmem:[#allocation2 + $0x60] sm:$0xff] 0.0
    %32 = vst [vmem:[#allocation2 + $0x68] sm:$0xff] 0.0
    %33 = vst [vmem:[#allocation2 + $0x70] sm:$0xff] 0.0
    %34 = vst [vmem:[#allocation2 + $0x78] sm:$0xff] 0.0
  $region17: #{appnp_forward.7} parent=0 // pred_fallthru
    _
  %v35 = vld [vmem:[#allocation2] sm:$0xff]
  %v36 = vld [vmem:[#allocation2 + $0x8] sm:$0xff]
  %v37 = vld [vmem:[#allocation2 + $0x10] sm:$0xff]
  %v38 = vld [vmem:[#allocation2 + $0x18] sm:$0xff]
  %v39 = vld [vmem:[#allocation2 + $0x20] sm:$0xff]
  %v40 = vld [vmem:[#allocation2 + $0x28] sm:$0xff]
  %v41 = vld [vmem:[#allocation2 + $0x30] sm:$0xff]
  %v42 = vld [vmem:[#allocation2 + $0x38] sm:$0xff]
  %v43 = vld [vmem:[#allocation2 + $0x40] sm:$0xff]
  %v44 = vld [vmem:[#allocation2 + $0x48] sm:$0xff]
  %v45 = vld [vmem:[#allocation2 + $0x50] sm:$0xff]
  %v46 = vld [vmem:[#allocation2 + $0x58] sm:$0xff]
  %v47 = vld [vmem:[#allocation2 + $0x60] sm:$0xff]
  %v48 = vld [vmem:[#allocation2 + $0x68] sm:$0xff]
  %v49 = vld [vmem:[#allocation2 + $0x70] sm:$0xff]
  %v50 = vld [vmem:[#allocation2 + $0x78] sm:$0xff]
  %v51 = vld [vmem:[%s0] sm:$0xf]
  %v52 = vld [vmem:[%s0 + $0x4] sm:$0xf]
  %v53 = vld [vmem:[%s0 + $0x8] sm:$0xf]
  %v54 = vld [vmem:[%s0 + $0xc] sm:$0xf]
  %v55 = vld [vmem:[%s0 + $0x10] sm:$0xf]
  %v56 = vld [vmem:[%s0 + $0x14] sm:$0xf]
  %v57 = vld [vmem:[%s0 + $0x18] sm:$0xf]
  %v58 = vld [vmem:[%s0 + $0x1c] sm:$0xf]
  %v59 = vld [vmem:[%s0 + $0x20] sm:$0xf]
  %v60 = vld [vmem:[%s0 + $0x24] sm:$0xf]
  %v61 = vld [vmem:[%s0 + $0x28] sm:$0xf]
  %v62 = vld [vmem:[%s0 + $0x2c] sm:$0xf]
  %v63 = vld [vmem:[%s0 + $0x30] sm:$0xf]
  %v64 = vld [vmem:[%s0 + $0x34] sm:$0xf]
  %v65 = vld [vmem:[%s0 + $0x38] sm:$0xf]
  %v66 = vld [vmem:[%s0 + $0x3c] sm:$0xf]
  %v67 = vld [vmem:[%s1] sm:$0xff]
  %v68 = vld [vmem:[%s1 + $0x8] sm:$0xff]
  %v69 = vld [vmem:[%s1 + $0x10] sm:$0xff]
  %v70 = vld [vmem:[%s1 + $0x18] sm:$0xff]
  %v71 = vld [vmem:[%s1 + $0x20] sm:$0xff]
  %v72 = vld [vmem:[%s1 + $0x28] sm:$0xff]
  %v73 = vld [vmem:[%s1 + $0x30] sm:$0xff]
  %v74 = vld [vmem:[%s1 + $0x38] sm:$0xff]
  %v75 = vld [vmem:[%s1 + $0x40] sm:$0xff]
  %v76 = vld [vmem:[%s1 + $0x48] sm:$0xff]
  %v77 = vld [vmem:[%s1 + $0x50] sm:$0xff]
  %v78 = vld [vmem:[%s1 + $0x58] sm:$0xff]
  %v79 = vld [vmem:[%s1 + $0x60] sm:$0xff]
  %v80 = vld [vmem:[%s1 + $0x68] sm:$0xff]
  %v81 = vld [vmem:[%s1 + $0x70] sm:$0xff]
  %v82 = vld [vmem:[%s1 + $0x78] sm:$0xff]
  %v83 = vpack.c.bf16 %v68, %v67
  %v84 = vpack.c.bf16 %v70, %v69
  %v85 = vpack.c.bf16 %v72, %v71
  %v86 = vpack.c.bf16 %v74, %v73
  %v87 = vpack.c.bf16 %v76, %v75
  %v88 = vpack.c.bf16 %v78, %v77
  %v89 = vpack.c.bf16 %v80, %v79
  %v90 = vpack.c.bf16 %v82, %v81
  %v107 = vunpack.c.l.b16 %v51
  %v108 = vunpack.c.l.b16 %v52
  %v109 = vunpack.c.l.b16 %v53
  %v110 = vunpack.c.l.b16 %v54
  %v111 = vunpack.c.l.b16 %v55
  %v112 = vunpack.c.l.b16 %v56
  %v113 = vunpack.c.l.b16 %v57
  %v114 = vunpack.c.l.b16 %v58
  %v115 = vunpack.c.l.b16 %v59
  %v116 = vunpack.c.l.b16 %v60
  %v117 = vunpack.c.l.b16 %v61
  %v118 = vunpack.c.l.b16 %v62
  %v119 = vunpack.c.l.b16 %v63
  %v120 = vunpack.c.l.b16 %v64
  %v121 = vunpack.c.l.b16 %v65
  %v122 = vunpack.c.l.b16 %v66
  %v123 = vpack.c.b16 %v108, %v107
  %v124 = vpack.c.b16 %v110, %v109
  %v125 = vpack.c.b16 %v112, %v111
  %v126 = vpack.c.b16 %v114, %v113
  %v127 = vpack.c.b16 %v116, %v115
  %v128 = vpack.c.b16 %v118, %v117
  %v129 = vpack.c.b16 %v120, %v119
  %v130 = vpack.c.b16 %v122, %v121
  %139 = vmatprep.subr.bf16.mxu0 0
  %140 = vmatpush1.bf16.msra.mxu0 %v83
  %141 = vmatprep.subr.bf16.mxu0 0
  %142 = vmatpush1.bf16.msra.mxu0 %v84
  %143 = vmatprep.subr.bf16.mxu0 0
  %144 = vmatpush1.bf16.msra.mxu0 %v85
  %145 = vmatprep.subr.bf16.mxu0 0
  %146 = vmatpush1.bf16.msra.mxu0 %v86
  %147 = vmatprep.subr.bf16.mxu0 0
  %148 = vmatpush1.bf16.msra.mxu0 %v87
  %149 = vmatprep.subr.bf16.mxu0 0
  %150 = vmatpush1.bf16.msra.mxu0 %v88
  %151 = vmatprep.subr.bf16.mxu0 0
  %152 = vmatpush1.bf16.msra.mxu0 %v89
  %153 = vmatprep.subr.bf16.mxu0 0
  %154 = vmatpush1.bf16.msra.mxu0 %v90
  %155 = vmatprep.subr.bf16.mxu0 0
  %156 = vmatpush1.bf16.msra.mxu0 0
  %157 = vmatprep.subr.bf16.mxu0 0
  %158 = vmatpush1.bf16.msra.mxu0 0
  %159 = vmatprep.subr.bf16.mxu0 0
  %160 = vmatpush1.bf16.msra.mxu0 0
  %161 = vmatprep.subr.bf16.mxu0 0
  %162 = vmatpush1.bf16.msra.mxu0 0
  %163 = vmatprep.subr.bf16.mxu0 0
  %164 = vmatpush1.bf16.msra.mxu0 0
  %165 = vmatprep.subr.bf16.mxu0 0
  %166 = vmatpush1.bf16.msra.mxu0 0
  %167 = vmatprep.subr.bf16.mxu0 0
  %168 = vmatpush1.bf16.msra.mxu0 0
  %169 = vmatprep.subr.bf16.mxu0 0
  %170 = vmatpush1.bf16.msra.mxu0 0
  %171 = vmatprep.mubr.bf16.mxu0 0
  %172 = vmatmul.mubr.bf16.gmra.mrb[0].mxu0 %v123
  %v173 = vpop.f32.mrb[0].mxu0
  %v174 = vadd.f32 0.0, %v173
  %v175 = vpop.f32.mrb[0].mxu0
  %v176 = vpop.f32.mrb[0].mxu0
  %v177 = vadd.f32 0.0, %v176
  %v178 = vpop.f32.mrb[0].mxu0
  %179 = vmatprep.mubr.bf16.mxu0 0
  %180 = vmatmul.mubr.bf16.gmra.mrb[0].mxu0 %v124
  %v181 = vpop.f32.mrb[0].mxu0
  %v182 = vadd.f32 0.0, %v181
  %v183 = vpop.f32.mrb[0].mxu0
  %v184 = vpop.f32.mrb[0].mxu0
  %v185 = vadd.f32 0.0, %v184
  %v186 = vpop.f32.mrb[0].mxu0
  %187 = vmatprep.mubr.bf16.mxu0 0
  %188 = vmatmul.mubr.bf16.gmra.mrb[0].mxu0 %v125
  %v189 = vpop.f32.mrb[0].mxu0
  %v190 = vadd.f32 0.0, %v189
  %v191 = vpop.f32.mrb[0].mxu0
  %v192 = vpop.f32.mrb[0].mxu0
  %v193 = vadd.f32 0.0, %v192
  %v194 = vpop.f32.mrb[0].mxu0
  %195 = vmatprep.mubr.bf16.mxu0 0
  %196 = vmatmul.mubr.bf16.gmra.mrb[0].mxu0 %v126
  %v197 = vpop.f32.mrb[0].mxu0
  %v198 = vadd.f32 0.0, %v197
  %v199 = vpop.f32.mrb[0].mxu0
  %v200 = vpop.f32.mrb[0].mxu0
  %v201 = vadd.f32 0.0, %v200
  %v202 = vpop.f32.mrb[0].mxu0
  %203 = vmatprep.mubr.bf16.mxu0 0
  %204 = vmatmul.mubr.bf16.gmra.mrb[0].mxu0 %v127
  %v205 = vpop.f32.mrb[0].mxu0
  %v206 = vadd.f32 0.0, %v205
  %v207 = vpop.f32.mrb[0].mxu0
  %v208 = vpop.f32.mrb[0].mxu0
  %v209 = vadd.f32 0.0, %v208
  %v210 = vpop.f32.mrb[0].mxu0
  %211 = vmatprep.mubr.bf16.mxu0 0
  %212 = vmatmul.mubr.bf16.gmra.mrb[0].mxu0 %v128
  %v213 = vpop.f32.mrb[0].mxu0
  %v214 = vadd.f32 0.0, %v213
  %v215 = vpop.f32.mrb[0].mxu0
  %v216 = vpop.f32.mrb[0].mxu0
  %v217 = vadd.f32 0.0, %v216
  %v218 = vpop.f32.mrb[0].mxu0
  %219 = vmatprep.mubr.bf16.mxu0 0
  %220 = vmatmul.mubr.bf16.gmra.mrb[0].mxu0 %v129
  %v221 = vpop.f32.mrb[0].mxu0
  %v222 = vadd.f32 0.0, %v221
  %v223 = vpop.f32.mrb[0].mxu0
  %v224 = vpop.f32.mrb[0].mxu0
  %v225 = vadd.f32 0.0, %v224
  %v226 = vpop.f32.mrb[0].mxu0
  %227 = vmatprep.mubr.bf16.mxu0 0
  %228 = vmatmul.mubr.bf16.gmra.mrb[0].mxu0 %v130
  %v229 = vpop.f32.mrb[0].mxu0
  %v230 = vadd.f32 0.0, %v229
  %v231 = vpop.f32.mrb[0].mxu0
  %v232 = vpop.f32.mrb[0].mxu0
  %v233 = vadd.f32 0.0, %v232
  %v234 = vpop.f32.mrb[0].mxu0
  %235 = vdwg.mxu0
  %v236 = vadd.f32 %v35, %v174
  %v237 = vadd.f32 %v36, %v177
  %v238 = vadd.f32 %v37, %v182
  %v239 = vadd.f32 %v38, %v185
  %v240 = vadd.f32 %v39, %v190
  %v241 = vadd.f32 %v40, %v193
  %v242 = vadd.f32 %v41, %v198
  %v243 = vadd.f32 %v42, %v201
  %v244 = vadd.f32 %v43, %v206
  %v245 = vadd.f32 %v44, %v209
  %v246 = vadd.f32 %v45, %v214
  %v247 = vadd.f32 %v46, %v217
  %v248 = vadd.f32 %v47, %v222
  %v249 = vadd.f32 %v48, %v225
  %v250 = vadd.f32 %v49, %v230
  %v251 = vadd.f32 %v50, %v233
  %252 = vst [vmem:[#allocation2] sm:$0xff] %v236
  %253 = vst [vmem:[#allocation2 + $0x8] sm:$0xff] %v237
  %254 = vst [vmem:[#allocation2 + $0x10] sm:$0xff] %v238
  %255 = vst [vmem:[#allocation2 + $0x18] sm:$0xff] %v239
  %256 = vst [vmem:[#allocation2 + $0x20] sm:$0xff] %v240
  %257 = vst [vmem:[#allocation2 + $0x28] sm:$0xff] %v241
  %258 = vst [vmem:[#allocation2 + $0x30] sm:$0xff] %v242
  %259 = vst [vmem:[#allocation2 + $0x38] sm:$0xff] %v243
  %260 = vst [vmem:[#allocation2 + $0x40] sm:$0xff] %v244
  %261 = vst [vmem:[#allocation2 + $0x48] sm:$0xff] %v245
  %262 = vst [vmem:[#allocation2 + $0x50] sm:$0xff] %v246
  %263 = vst [vmem:[#allocation2 + $0x58] sm:$0xff] %v247
  %264 = vst [vmem:[#allocation2 + $0x60] sm:$0xff] %v248
  %265 = vst [vmem:[#allocation2 + $0x68] sm:$0xff] %v249
  %266 = vst [vmem:[#allocation2 + $0x70] sm:$0xff] %v250
  %267 = vst [vmem:[#allocation2 + $0x78] sm:$0xff] %v251
  // Predicated region
  $region18: #{appnp_forward.7} parent=0 // pred_check
    %p268 = pneg %p15
  $region19: #{appnp_forward.7} parent=0 // pred_check_branch
    %270 = sbr.rel (%p268) target = $region21
  $region20: #{appnp_forward.7} parent=0 // pred_region
    %v271 = vld [vmem:[#allocation2] sm:$0xff]
    %v272 = vld [vmem:[#allocation2 + $0x8] sm:$0xff]
    %v273 = vld [vmem:[#allocation2 + $0x10] sm:$0xff]
    %v274 = vld [vmem:[#allocation2 + $0x18] sm:$0xff]
    %v275 = vld [vmem:[#allocation2 + $0x20] sm:$0xff]
    %v276 = vld [vmem:[#allocation2 + $0x28] sm:$0xff]
    %v277 = vld [vmem:[#allocation2 + $0x30] sm:$0xff]
    %v278 = vld [vmem:[#allocation2 + $0x38] sm:$0xff]
    %v279 = vld [vmem:[#allocation2 + $0x40] sm:$0xff]
    %v280 = vld [vmem:[#allocation2 + $0x48] sm:$0xff]
    %v281 = vld [vmem:[#allocation2 + $0x50] sm:$0xff]
    %v282 = vld [vmem:[#allocation2 + $0x58] sm:$0xff]
    %v283 = vld [vmem:[#allocation2 + $0x60] sm:$0xff]
    %v284 = vld [vmem:[#allocation2 + $0x68] sm:$0xff]
    %v285 = vld [vmem:[#allocation2 + $0x70] sm:$0xff]
    %v286 = vld [vmem:[#allocation2 + $0x78] sm:$0xff]
    %v287 = vmul.f32 %v271, 0.9
    %v288 = vmul.f32 %v272, 0.9
    %v289 = vmul.f32 %v273, 0.9
    %v290 = vmul.f32 %v274, 0.9
    %v291 = vmul.f32 %v275, 0.9
    %v292 = vmul.f32 %v276, 0.9
    %v293 = vmul.f32 %v277, 0.9
    %v294 = vmul.f32 %v278, 0.9
    %v295 = vmul.f32 %v279, 0.9
    %v296 = vmul.f32 %v280, 0.9
    %v297 = vmul.f32 %v281, 0.9
    %v298 = vmul.f32 %v282, 0.9
    %v299 = vmul.f32 %v283, 0.9
    %v300 = vmul.f32 %v284, 0.9
    %v301 = vmul.f32 %v285, 0.9
    %v302 = vmul.f32 %v286, 0.9
    %v303 = vld [vmem:[%s2] sm:$0xff]
    %v304 = vld [vmem:[%s2 + $0x8] sm:$0xff]
    %v305 = vld [vmem:[%s2 + $0x10] sm:$0xff]
    %v306 = vld [vmem:[%s2 + $0x18] sm:$0xff]
    %v307 = vld [vmem:[%s2 + $0x20] sm:$0xff]
    %v308 = vld [vmem:[%s2 + $0x28] sm:$0xff]
    %v309 = vld [vmem:[%s2 + $0x30] sm:$0xff]
    %v310 = vld [vmem:[%s2 + $0x38] sm:$0xff]
    %v311 = vld [vmem:[%s2 + $0x40] sm:$0xff]
    %v312 = vld [vmem:[%s2 + $0x48] sm:$0xff]
    %v313 = vld [vmem:[%s2 + $0x50] sm:$0xff]
    %v314 = vld [vmem:[%s2 + $0x58] sm:$0xff]
    %v315 = vld [vmem:[%s2 + $0x60] sm:$0xff]
    %v316 = vld [vmem:[%s2 + $0x68] sm:$0xff]
    %v317 = vld [vmem:[%s2 + $0x70] sm:$0xff]
    %v318 = vld [vmem:[%s2 + $0x78] sm:$0xff]
    %v319 = vmul.f32 %v303, 0.1
    %v320 = vmul.f32 %v304, 0.1
    %v321 = vmul.f32 %v305, 0.1
    %v322 = vmul.f32 %v306, 0.1
    %v323 = vmul.f32 %v307, 0.1
    %v324 = vmul.f32 %v308, 0.1
    %v325 = vmul.f32 %v309, 0.1
    %v326 = vmul.f32 %v310, 0.1
    %v327 = vmul.f32 %v311, 0.1
    %v328 = vmul.f32 %v312, 0.1
    %v329 = vmul.f32 %v313, 0.1
    %v330 = vmul.f32 %v314, 0.1
    %v331 = vmul.f32 %v315, 0.1
    %v332 = vmul.f32 %v316, 0.1
    %v333 = vmul.f32 %v317, 0.1
    %v334 = vmul.f32 %v318, 0.1
    %v335 = vadd.f32 %v287, %v319
    %v336 = vadd.f32 %v288, %v320
    %v337 = vadd.f32 %v289, %v321
    %v338 = vadd.f32 %v290, %v322
    %v339 = vadd.f32 %v291, %v323
    %v340 = vadd.f32 %v292, %v324
    %v341 = vadd.f32 %v293, %v325
    %v342 = vadd.f32 %v294, %v326
    %v343 = vadd.f32 %v295, %v327
    %v344 = vadd.f32 %v296, %v328
    %v345 = vadd.f32 %v297, %v329
    %v346 = vadd.f32 %v298, %v330
    %v347 = vadd.f32 %v299, %v331
    %v348 = vadd.f32 %v300, %v332
    %v349 = vadd.f32 %v301, %v333
    %v350 = vadd.f32 %v302, %v334
    %351 = vst [vmem:[%s3] sm:$0xff] %v335
    %352 = vst [vmem:[%s3 + $0x8] sm:$0xff] %v336
    %353 = vst [vmem:[%s3 + $0x10] sm:$0xff] %v337
    %354 = vst [vmem:[%s3 + $0x18] sm:$0xff] %v338
    %355 = vst [vmem:[%s3 + $0x20] sm:$0xff] %v339
    %356 = vst [vmem:[%s3 + $0x28] sm:$0xff] %v340
    %357 = vst [vmem:[%s3 + $0x30] sm:$0xff] %v341
    %358 = vst [vmem:[%s3 + $0x38] sm:$0xff] %v342
    %359 = vst [vmem:[%s3 + $0x40] sm:$0xff] %v343
    %360 = vst [vmem:[%s3 + $0x48] sm:$0xff] %v344
    %361 = vst [vmem:[%s3 + $0x50] sm:$0xff] %v345
    %362 = vst [vmem:[%s3 + $0x58] sm:$0xff] %v346
    %363 = vst [vmem:[%s3 + $0x60] sm:$0xff] %v347
    %364 = vst [vmem:[%s3 + $0x68] sm:$0xff] %v348
    %365 = vst [vmem:[%s3 + $0x70] sm:$0xff] %v349
    %366 = vst [vmem:[%s3 + $0x78] sm:$0xff] %v350
  $region21: #{appnp_forward.7} parent=0 // pred_fallthru
    _
  // Predicated region
  $region22: #{appnp_forward.7} parent=0 // pred_check
    _
  $region23: #{appnp_forward.7} parent=0 // pred_check_branch
    %368 = sbr.rel (0) target = $region25
  $region24: #{appnp_forward.7} parent=0 // pred_region
    _
  $region25: #{appnp_forward.7} parent=0 // pred_fallthru
    _
  // Predicated region
  $region26: #{appnp_forward.7} parent=0 // pred_check
    _
  $region27: #{appnp_forward.7} parent=0 // pred_check_branch
    %370 = sbr.rel (0) target = $region29
  $region28: #{appnp_forward.7} parent=0 // pred_region
    _
  $region29: #{appnp_forward.7} parent=0 // pred_fallthru
    _

// kernel: appnp_forward.11
$region0: #{appnp_forward.11}
  #allocation0 [shape = 'u32[]', space=smem, size = 0x4, offset = 0x4, fixed_abs, tag = 'smem constant byte address 0x4 - core index']
  #allocation1 [shape = 'u32[144,128]{1,0:T(1,128)}', space=vmem, size = 0x12000, scoped, tag = 'internal scratch']
  #allocation2 [shape = 'f32[128,128]{1,0:T(8,128)}', space=vmem, size = 0x10000, scoped, tag = 'scratch operand']
  %s0 = inlined_call_operand.vmem [shape: bf16[128,128], index: 0, kind: input, shape index: {}]
  %s1 = inlined_call_operand.vmem [shape: f32[128,128], index: 1, kind: input, shape index: {}]
  %s2 = inlined_call_operand.vmem [shape: f32[128,128], index: 2, kind: input, shape index: {}]
  %s3 = inlined_call_operand.vmem [shape: f32[128,128], index: 3, kind: output, shape index: {}]
  %s4 = sld [smem:[#allocation0]]
  $region30: #{appnp_forward.11} parent=0
    _
  %s6 = ssub.s32 1, %s4
  %s7 = scalar_select 0, %s6, %s4
  // Predicated region
  $region2: #{appnp_forward.11} parent=0 // pred_check
    _
  $region3: #{appnp_forward.11} parent=0 // pred_check_branch
    %9 = sbr.rel (0) target = $region5
  $region4: #{appnp_forward.11} parent=0 // pred_region
    _
  $region5: #{appnp_forward.11} parent=0 // pred_fallthru
    _
  // Predicated region
  $region6: #{appnp_forward.11} parent=0 // pred_check
    _
  $region7: #{appnp_forward.11} parent=0 // pred_check_branch
    %11 = sbr.rel (0) target = $region9
  $region8: #{appnp_forward.11} parent=0 // pred_region
    _
  $region9: #{appnp_forward.11} parent=0 // pred_fallthru
    _
  // Predicated region
  $region10: #{appnp_forward.11} parent=0 // pred_check
    _
  $region11: #{appnp_forward.11} parent=0 // pred_check_branch
    %13 = sbr.rel (0) target = $region13
  $region12: #{appnp_forward.11} parent=0 // pred_region
    _
  $region13: #{appnp_forward.11} parent=0 // pred_fallthru
    _
  %p15 = scmp.eq.s32.totalorder 0, 0
  // Predicated region
  $region14: #{appnp_forward.11} parent=0 // pred_check
    %p16 = pneg %p15
  $region15: #{appnp_forward.11} parent=0 // pred_check_branch
    %18 = sbr.rel (%p16) target = $region17
  $region16: #{appnp_forward.11} parent=0 // pred_region
    %19 = vst [vmem:[#allocation2] sm:$0xff] 0.0
    %20 = vst [vmem:[#allocation2 + $0x8] sm:$0xff] 0.0
    %21 = vst [vmem:[#allocation2 + $0x10] sm:$0xff] 0.0
    %22 = vst [vmem:[#allocation2 + $0x18] sm:$0xff] 0.0
    %23 = vst [vmem:[#allocation2 + $0x20] sm:$0xff] 0.0
    %24 = vst [vmem:[#allocation2 + $0x28] sm:$0xff] 0.0
    %25 = vst [vmem:[#allocation2 + $0x30] sm:$0xff] 0.0
    %26 = vst [vmem:[#allocation2 + $0x38] sm:$0xff] 0.0
    %27 = vst [vmem:[#allocation2 + $0x40] sm:$0xff] 0.0
    %28 = vst [vmem:[#allocation2 + $0x48] sm:$0xff] 0.0
    %29 = vst [vmem:[#allocation2 + $0x50] sm:$0xff] 0.0
    %30 = vst [vmem:[#allocation2 + $0x58] sm:$0xff] 0.0
    %31 = vst [vmem:[#allocation2 + $0x60] sm:$0xff] 0.0
    %32 = vst [vmem:[#allocation2 + $0x68] sm:$0xff] 0.0
    %33 = vst [vmem:[#allocation2 + $0x70] sm:$0xff] 0.0
    %34 = vst [vmem:[#allocation2 + $0x78] sm:$0xff] 0.0
  $region17: #{appnp_forward.11} parent=0 // pred_fallthru
    _
  %v35 = vld [vmem:[#allocation2] sm:$0xff]
  %v36 = vld [vmem:[#allocation2 + $0x8] sm:$0xff]
  %v37 = vld [vmem:[#allocation2 + $0x10] sm:$0xff]
  %v38 = vld [vmem:[#allocation2 + $0x18] sm:$0xff]
  %v39 = vld [vmem:[#allocation2 + $0x20] sm:$0xff]
  %v40 = vld [vmem:[#allocation2 + $0x28] sm:$0xff]
  %v41 = vld [vmem:[#allocation2 + $0x30] sm:$0xff]
  %v42 = vld [vmem:[#allocation2 + $0x38] sm:$0xff]
  %v43 = vld [vmem:[#allocation2 + $0x40] sm:$0xff]
  %v44 = vld [vmem:[#allocation2 + $0x48] sm:$0xff]
  %v45 = vld [vmem:[#allocation2 + $0x50] sm:$0xff]
  %v46 = vld [vmem:[#allocation2 + $0x58] sm:$0xff]
  %v47 = vld [vmem:[#allocation2 + $0x60] sm:$0xff]
  %v48 = vld [vmem:[#allocation2 + $0x68] sm:$0xff]
  %v49 = vld [vmem:[#allocation2 + $0x70] sm:$0xff]
  %v50 = vld [vmem:[#allocation2 + $0x78] sm:$0xff]
  %v51 = vld [vmem:[%s0] sm:$0xf]
  %v52 = vld [vmem:[%s0 + $0x4] sm:$0xf]
  %v53 = vld [vmem:[%s0 + $0x8] sm:$0xf]
  %v54 = vld [vmem:[%s0 + $0xc] sm:$0xf]
  %v55 = vld [vmem:[%s0 + $0x10] sm:$0xf]
  %v56 = vld [vmem:[%s0 + $0x14] sm:$0xf]
  %v57 = vld [vmem:[%s0 + $0x18] sm:$0xf]
  %v58 = vld [vmem:[%s0 + $0x1c] sm:$0xf]
  %v59 = vld [vmem:[%s0 + $0x20] sm:$0xf]
  %v60 = vld [vmem:[%s0 + $0x24] sm:$0xf]
  %v61 = vld [vmem:[%s0 + $0x28] sm:$0xf]
  %v62 = vld [vmem:[%s0 + $0x2c] sm:$0xf]
  %v63 = vld [vmem:[%s0 + $0x30] sm:$0xf]
  %v64 = vld [vmem:[%s0 + $0x34] sm:$0xf]
  %v65 = vld [vmem:[%s0 + $0x38] sm:$0xf]
  %v66 = vld [vmem:[%s0 + $0x3c] sm:$0xf]
  %v67 = vld [vmem:[%s1] sm:$0xff]
  %v68 = vld [vmem:[%s1 + $0x8] sm:$0xff]
  %v69 = vld [vmem:[%s1 + $0x10] sm:$0xff]
  %v70 = vld [vmem:[%s1 + $0x18] sm:$0xff]
  %v71 = vld [vmem:[%s1 + $0x20] sm:$0xff]
  %v72 = vld [vmem:[%s1 + $0x28] sm:$0xff]
  %v73 = vld [vmem:[%s1 + $0x30] sm:$0xff]
  %v74 = vld [vmem:[%s1 + $0x38] sm:$0xff]
  %v75 = vld [vmem:[%s1 + $0x40] sm:$0xff]
  %v76 = vld [vmem:[%s1 + $0x48] sm:$0xff]
  %v77 = vld [vmem:[%s1 + $0x50] sm:$0xff]
  %v78 = vld [vmem:[%s1 + $0x58] sm:$0xff]
  %v79 = vld [vmem:[%s1 + $0x60] sm:$0xff]
  %v80 = vld [vmem:[%s1 + $0x68] sm:$0xff]
  %v81 = vld [vmem:[%s1 + $0x70] sm:$0xff]
  %v82 = vld [vmem:[%s1 + $0x78] sm:$0xff]
  %v83 = vpack.c.bf16 %v68, %v67
  %v84 = vpack.c.bf16 %v70, %v69
  %v85 = vpack.c.bf16 %v72, %v71
  %v86 = vpack.c.bf16 %v74, %v73
  %v87 = vpack.c.bf16 %v76, %v75
  %v88 = vpack.c.bf16 %v78, %v77
  %v89 = vpack.c.bf16 %v80, %v79
  %v90 = vpack.c.bf16 %v82, %v81
  %v107 = vunpack.c.l.b16 %v51
  %v108 = vunpack.c.l.b16 %v52
  %v109 = vunpack.c.l.b16 %v53
  %v110 = vunpack.c.l.b16 %v54
  %v111 = vunpack.c.l.b16 %v55
  %v112 = vunpack.c.l.b16 %v56
  %v113 = vunpack.c.l.b16 %v57
  %v114 = vunpack.c.l.b16 %v58
  %v115 = vunpack.c.l.b16 %v59
  %v116 = vunpack.c.l.b16 %v60
  %v117 = vunpack.c.l.b16 %v61
  %v118 = vunpack.c.l.b16 %v62
  %v119 = vunpack.c.l.b16 %v63
  %v120 = vunpack.c.l.b16 %v64
  %v121 = vunpack.c.l.b16 %v65
  %v122 = vunpack.c.l.b16 %v66
  %v123 = vpack.c.b16 %v108, %v107
  %v124 = vpack.c.b16 %v110, %v109
  %v125 = vpack.c.b16 %v112, %v111
  %v126 = vpack.c.b16 %v114, %v113
  %v127 = vpack.c.b16 %v116, %v115
  %v128 = vpack.c.b16 %v118, %v117
  %v129 = vpack.c.b16 %v120, %v119
  %v130 = vpack.c.b16 %v122, %v121
  %139 = vmatprep.subr.bf16.mxu0 0
  %140 = vmatpush1.bf16.msra.mxu0 %v83
  %141 = vmatprep.subr.bf16.mxu0 0
  %142 = vmatpush1.bf16.msra.mxu0 %v84
  %143 = vmatprep.subr.bf16.mxu0 0
  %144 = vmatpush1.bf16.msra.mxu0 %v85
  %145 = vmatprep.subr.bf16.mxu0 0
  %146 = vmatpush1.bf16.msra.mxu0 %v86
  %147 = vmatprep.subr.bf16.mxu0 0
  %148 = vmatpush1.bf16.msra.mxu0 %v87
  %149 = vmatprep.subr.bf16.mxu0 0
  %150 = vmatpush1.bf16.msra.mxu0 %v88
  %151 = vmatprep.subr.bf16.mxu0 0
  %152 = vmatpush1.bf16.msra.mxu0 %v89
  %153 = vmatprep.subr.bf16.mxu0 0
  %154 = vmatpush1.bf16.msra.mxu0 %v90
  %155 = vmatprep.subr.bf16.mxu0 0
  %156 = vmatpush1.bf16.msra.mxu0 0
  %157 = vmatprep.subr.bf16.mxu0 0
  %158 = vmatpush1.bf16.msra.mxu0 0
  %159 = vmatprep.subr.bf16.mxu0 0
  %160 = vmatpush1.bf16.msra.mxu0 0
  %161 = vmatprep.subr.bf16.mxu0 0
  %162 = vmatpush1.bf16.msra.mxu0 0
  %163 = vmatprep.subr.bf16.mxu0 0
  %164 = vmatpush1.bf16.msra.mxu0 0
  %165 = vmatprep.subr.bf16.mxu0 0
  %166 = vmatpush1.bf16.msra.mxu0 0
  %167 = vmatprep.subr.bf16.mxu0 0
  %168 = vmatpush1.bf16.msra.mxu0 0
  %169 = vmatprep.subr.bf16.mxu0 0
  %170 = vmatpush1.bf16.msra.mxu0 0
  %171 = vmatprep.mubr.bf16.mxu0 0
  %172 = vmatmul.mubr.bf16.gmra.mrb[0].mxu0 %v123
  %v173 = vpop.f32.mrb[0].mxu0
  %v174 = vadd.f32 0.0, %v173
  %v175 = vpop.f32.mrb[0].mxu0
  %v176 = vpop.f32.mrb[0].mxu0
  %v177 = vadd.f32 0.0, %v176
  %v178 = vpop.f32.mrb[0].mxu0
  %179 = vmatprep.mubr.bf16.mxu0 0
  %180 = vmatmul.mubr.bf16.gmra.mrb[0].mxu0 %v124
  %v181 = vpop.f32.mrb[0].mxu0
  %v182 = vadd.f32 0.0, %v181
  %v183 = vpop.f32.mrb[0].mxu0
  %v184 = vpop.f32.mrb[0].mxu0
  %v185 = vadd.f32 0.0, %v184
  %v186 = vpop.f32.mrb[0].mxu0
  %187 = vmatprep.mubr.bf16.mxu0 0
  %188 = vmatmul.mubr.bf16.gmra.mrb[0].mxu0 %v125
  %v189 = vpop.f32.mrb[0].mxu0
  %v190 = vadd.f32 0.0, %v189
  %v191 = vpop.f32.mrb[0].mxu0
  %v192 = vpop.f32.mrb[0].mxu0
  %v193 = vadd.f32 0.0, %v192
  %v194 = vpop.f32.mrb[0].mxu0
  %195 = vmatprep.mubr.bf16.mxu0 0
  %196 = vmatmul.mubr.bf16.gmra.mrb[0].mxu0 %v126
  %v197 = vpop.f32.mrb[0].mxu0
  %v198 = vadd.f32 0.0, %v197
  %v199 = vpop.f32.mrb[0].mxu0
  %v200 = vpop.f32.mrb[0].mxu0
  %v201 = vadd.f32 0.0, %v200
  %v202 = vpop.f32.mrb[0].mxu0
  %203 = vmatprep.mubr.bf16.mxu0 0
  %204 = vmatmul.mubr.bf16.gmra.mrb[0].mxu0 %v127
  %v205 = vpop.f32.mrb[0].mxu0
  %v206 = vadd.f32 0.0, %v205
  %v207 = vpop.f32.mrb[0].mxu0
  %v208 = vpop.f32.mrb[0].mxu0
  %v209 = vadd.f32 0.0, %v208
  %v210 = vpop.f32.mrb[0].mxu0
  %211 = vmatprep.mubr.bf16.mxu0 0
  %212 = vmatmul.mubr.bf16.gmra.mrb[0].mxu0 %v128
  %v213 = vpop.f32.mrb[0].mxu0
  %v214 = vadd.f32 0.0, %v213
  %v215 = vpop.f32.mrb[0].mxu0
  %v216 = vpop.f32.mrb[0].mxu0
  %v217 = vadd.f32 0.0, %v216
  %v218 = vpop.f32.mrb[0].mxu0
  %219 = vmatprep.mubr.bf16.mxu0 0
  %220 = vmatmul.mubr.bf16.gmra.mrb[0].mxu0 %v129
  %v221 = vpop.f32.mrb[0].mxu0
  %v222 = vadd.f32 0.0, %v221
  %v223 = vpop.f32.mrb[0].mxu0
  %v224 = vpop.f32.mrb[0].mxu0
  %v225 = vadd.f32 0.0, %v224
  %v226 = vpop.f32.mrb[0].mxu0
  %227 = vmatprep.mubr.bf16.mxu0 0
  %228 = vmatmul.mubr.bf16.gmra.mrb[0].mxu0 %v130
  %v229 = vpop.f32.mrb[0].mxu0
  %v230 = vadd.f32 0.0, %v229
  %v231 = vpop.f32.mrb[0].mxu0
  %v232 = vpop.f32.mrb[0].mxu0
  %v233 = vadd.f32 0.0, %v232
  %v234 = vpop.f32.mrb[0].mxu0
  %235 = vdwg.mxu0
  %v236 = vadd.f32 %v35, %v174
  %v237 = vadd.f32 %v36, %v177
  %v238 = vadd.f32 %v37, %v182
  %v239 = vadd.f32 %v38, %v185
  %v240 = vadd.f32 %v39, %v190
  %v241 = vadd.f32 %v40, %v193
  %v242 = vadd.f32 %v41, %v198
  %v243 = vadd.f32 %v42, %v201
  %v244 = vadd.f32 %v43, %v206
  %v245 = vadd.f32 %v44, %v209
  %v246 = vadd.f32 %v45, %v214
  %v247 = vadd.f32 %v46, %v217
  %v248 = vadd.f32 %v47, %v222
  %v249 = vadd.f32 %v48, %v225
  %v250 = vadd.f32 %v49, %v230
  %v251 = vadd.f32 %v50, %v233
  %252 = vst [vmem:[#allocation2] sm:$0xff] %v236
  %253 = vst [vmem:[#allocation2 + $0x8] sm:$0xff] %v237
  %254 = vst [vmem:[#allocation2 + $0x10] sm:$0xff] %v238
  %255 = vst [vmem:[#allocation2 + $0x18] sm:$0xff] %v239
  %256 = vst [vmem:[#allocation2 + $0x20] sm:$0xff] %v240
  %257 = vst [vmem:[#allocation2 + $0x28] sm:$0xff] %v241
  %258 = vst [vmem:[#allocation2 + $0x30] sm:$0xff] %v242
  %259 = vst [vmem:[#allocation2 + $0x38] sm:$0xff] %v243
  %260 = vst [vmem:[#allocation2 + $0x40] sm:$0xff] %v244
  %261 = vst [vmem:[#allocation2 + $0x48] sm:$0xff] %v245
  %262 = vst [vmem:[#allocation2 + $0x50] sm:$0xff] %v246
  %263 = vst [vmem:[#allocation2 + $0x58] sm:$0xff] %v247
  %264 = vst [vmem:[#allocation2 + $0x60] sm:$0xff] %v248
  %265 = vst [vmem:[#allocation2 + $0x68] sm:$0xff] %v249
  %266 = vst [vmem:[#allocation2 + $0x70] sm:$0xff] %v250
  %267 = vst [vmem:[#allocation2 + $0x78] sm:$0xff] %v251
  // Predicated region
  $region18: #{appnp_forward.11} parent=0 // pred_check
    %p268 = pneg %p15
  $region19: #{appnp_forward.11} parent=0 // pred_check_branch
    %270 = sbr.rel (%p268) target = $region21
  $region20: #{appnp_forward.11} parent=0 // pred_region
    %v271 = vld [vmem:[#allocation2] sm:$0xff]
    %v272 = vld [vmem:[#allocation2 + $0x8] sm:$0xff]
    %v273 = vld [vmem:[#allocation2 + $0x10] sm:$0xff]
    %v274 = vld [vmem:[#allocation2 + $0x18] sm:$0xff]
    %v275 = vld [vmem:[#allocation2 + $0x20] sm:$0xff]
    %v276 = vld [vmem:[#allocation2 + $0x28] sm:$0xff]
    %v277 = vld [vmem:[#allocation2 + $0x30] sm:$0xff]
    %v278 = vld [vmem:[#allocation2 + $0x38] sm:$0xff]
    %v279 = vld [vmem:[#allocation2 + $0x40] sm:$0xff]
    %v280 = vld [vmem:[#allocation2 + $0x48] sm:$0xff]
    %v281 = vld [vmem:[#allocation2 + $0x50] sm:$0xff]
    %v282 = vld [vmem:[#allocation2 + $0x58] sm:$0xff]
    %v283 = vld [vmem:[#allocation2 + $0x60] sm:$0xff]
    %v284 = vld [vmem:[#allocation2 + $0x68] sm:$0xff]
    %v285 = vld [vmem:[#allocation2 + $0x70] sm:$0xff]
    %v286 = vld [vmem:[#allocation2 + $0x78] sm:$0xff]
    %v287 = vmul.f32 %v271, 0.9
    %v288 = vmul.f32 %v272, 0.9
    %v289 = vmul.f32 %v273, 0.9
    %v290 = vmul.f32 %v274, 0.9
    %v291 = vmul.f32 %v275, 0.9
    %v292 = vmul.f32 %v276, 0.9
    %v293 = vmul.f32 %v277, 0.9
    %v294 = vmul.f32 %v278, 0.9
    %v295 = vmul.f32 %v279, 0.9
    %v296 = vmul.f32 %v280, 0.9
    %v297 = vmul.f32 %v281, 0.9
    %v298 = vmul.f32 %v282, 0.9
    %v299 = vmul.f32 %v283, 0.9
    %v300 = vmul.f32 %v284, 0.9
    %v301 = vmul.f32 %v285, 0.9
    %v302 = vmul.f32 %v286, 0.9
    %v303 = vld [vmem:[%s2] sm:$0xff]
    %v304 = vld [vmem:[%s2 + $0x8] sm:$0xff]
    %v305 = vld [vmem:[%s2 + $0x10] sm:$0xff]
    %v306 = vld [vmem:[%s2 + $0x18] sm:$0xff]
    %v307 = vld [vmem:[%s2 + $0x20] sm:$0xff]
    %v308 = vld [vmem:[%s2 + $0x28] sm:$0xff]
    %v309 = vld [vmem:[%s2 + $0x30] sm:$0xff]
    %v310 = vld [vmem:[%s2 + $0x38] sm:$0xff]
    %v311 = vld [vmem:[%s2 + $0x40] sm:$0xff]
    %v312 = vld [vmem:[%s2 + $0x48] sm:$0xff]
    %v313 = vld [vmem:[%s2 + $0x50] sm:$0xff]
    %v314 = vld [vmem:[%s2 + $0x58] sm:$0xff]
    %v315 = vld [vmem:[%s2 + $0x60] sm:$0xff]
    %v316 = vld [vmem:[%s2 + $0x68] sm:$0xff]
    %v317 = vld [vmem:[%s2 + $0x70] sm:$0xff]
    %v318 = vld [vmem:[%s2 + $0x78] sm:$0xff]
    %v319 = vmul.f32 %v303, 0.1
    %v320 = vmul.f32 %v304, 0.1
    %v321 = vmul.f32 %v305, 0.1
    %v322 = vmul.f32 %v306, 0.1
    %v323 = vmul.f32 %v307, 0.1
    %v324 = vmul.f32 %v308, 0.1
    %v325 = vmul.f32 %v309, 0.1
    %v326 = vmul.f32 %v310, 0.1
    %v327 = vmul.f32 %v311, 0.1
    %v328 = vmul.f32 %v312, 0.1
    %v329 = vmul.f32 %v313, 0.1
    %v330 = vmul.f32 %v314, 0.1
    %v331 = vmul.f32 %v315, 0.1
    %v332 = vmul.f32 %v316, 0.1
    %v333 = vmul.f32 %v317, 0.1
    %v334 = vmul.f32 %v318, 0.1
    %v335 = vadd.f32 %v287, %v319
    %v336 = vadd.f32 %v288, %v320
    %v337 = vadd.f32 %v289, %v321
    %v338 = vadd.f32 %v290, %v322
    %v339 = vadd.f32 %v291, %v323
    %v340 = vadd.f32 %v292, %v324
    %v341 = vadd.f32 %v293, %v325
    %v342 = vadd.f32 %v294, %v326
    %v343 = vadd.f32 %v295, %v327
    %v344 = vadd.f32 %v296, %v328
    %v345 = vadd.f32 %v297, %v329
    %v346 = vadd.f32 %v298, %v330
    %v347 = vadd.f32 %v299, %v331
    %v348 = vadd.f32 %v300, %v332
    %v349 = vadd.f32 %v301, %v333
    %v350 = vadd.f32 %v302, %v334
    %v351 = vlaneseq
    %v352 = vand.u32 %v351, 127
    %vm353 = vcmp.lt.s32.totalorder %v352, 4
    %v354 = vsel %vm353, %v335, -1e+30
    %v355 = vsel %vm353, %v336, -1e+30
    %v356 = vsel %vm353, %v337, -1e+30
    %v357 = vsel %vm353, %v338, -1e+30
    %v358 = vsel %vm353, %v339, -1e+30
    %v359 = vsel %vm353, %v340, -1e+30
    %v360 = vsel %vm353, %v341, -1e+30
    %v361 = vsel %vm353, %v342, -1e+30
    %v362 = vsel %vm353, %v343, -1e+30
    %v363 = vsel %vm353, %v344, -1e+30
    %v364 = vsel %vm353, %v345, -1e+30
    %v365 = vsel %vm353, %v346, -1e+30
    %v366 = vsel %vm353, %v347, -1e+30
    %v367 = vsel %vm353, %v348, -1e+30
    %v368 = vsel %vm353, %v349, -1e+30
    %v369 = vsel %vm353, %v350, -1e+30
    %370 = vmax.xlane.f32.xlu0 %v354
    %v371 = vpop.xlane.xlu0 %370
    %372 = vmax.xlane.f32.xlu0 %v355
    %v373 = vpop.xlane.xlu0 %372
    %374 = vmax.xlane.f32.xlu0 %v356
    %v375 = vpop.xlane.xlu0 %374
    %376 = vmax.xlane.f32.xlu0 %v357
    %v377 = vpop.xlane.xlu0 %376
    %378 = vmax.xlane.f32.xlu0 %v358
    %v379 = vpop.xlane.xlu0 %378
    %380 = vmax.xlane.f32.xlu0 %v359
    %v381 = vpop.xlane.xlu0 %380
    %382 = vmax.xlane.f32.xlu0 %v360
    %v383 = vpop.xlane.xlu0 %382
    %384 = vmax.xlane.f32.xlu0 %v361
    %v385 = vpop.xlane.xlu0 %384
    %386 = vmax.xlane.f32.xlu0 %v362
    %v387 = vpop.xlane.xlu0 %386
    %388 = vmax.xlane.f32.xlu0 %v363
    %v389 = vpop.xlane.xlu0 %388
    %390 = vmax.xlane.f32.xlu0 %v364
    %v391 = vpop.xlane.xlu0 %390
    %392 = vmax.xlane.f32.xlu0 %v365
    %v393 = vpop.xlane.xlu0 %392
    %394 = vmax.xlane.f32.xlu0 %v366
    %v395 = vpop.xlane.xlu0 %394
    %396 = vmax.xlane.f32.xlu0 %v367
    %v397 = vpop.xlane.xlu0 %396
    %398 = vmax.xlane.f32.xlu0 %v368
    %v399 = vpop.xlane.xlu0 %398
    %400 = vmax.xlane.f32.xlu0 %v369
    %v401 = vpop.xlane.xlu0 %400
    %v402 = vsub.f32 %v354, %v371
    %v403 = vsub.f32 %v355, %v373
    %v404 = vsub.f32 %v356, %v375
    %v405 = vsub.f32 %v357, %v377
    %v406 = vsub.f32 %v358, %v379
    %v407 = vsub.f32 %v359, %v381
    %v408 = vsub.f32 %v360, %v383
    %v409 = vsub.f32 %v361, %v385
    %v410 = vsub.f32 %v362, %v387
    %v411 = vsub.f32 %v363, %v389
    %v412 = vsub.f32 %v364, %v391
    %v413 = vsub.f32 %v365, %v393
    %v414 = vsub.f32 %v366, %v395
    %v415 = vsub.f32 %v367, %v397
    %v416 = vsub.f32 %v368, %v399
    %v417 = vsub.f32 %v369, %v401
    %v418 = vmul.f32 %v402, 1.442695
    %v419 = vpow.pop %v418
    %v420 = vmul.f32 %v403, 1.442695
    %v421 = vpow.pop %v420
    %v422 = vmul.f32 %v404, 1.442695
    %v423 = vpow.pop %v422
    %v424 = vmul.f32 %v405, 1.442695
    %v425 = vpow.pop %v424
    %v426 = vmul.f32 %v406, 1.442695
    %v427 = vpow.pop %v426
    %v428 = vmul.f32 %v407, 1.442695
    %v429 = vpow.pop %v428
    %v430 = vmul.f32 %v408, 1.442695
    %v431 = vpow.pop %v430
    %v432 = vmul.f32 %v409, 1.442695
    %v433 = vpow.pop %v432
    %v434 = vmul.f32 %v410, 1.442695
    %v435 = vpow.pop %v434
    %v436 = vmul.f32 %v411, 1.442695
    %v437 = vpow.pop %v436
    %v438 = vmul.f32 %v412, 1.442695
    %v439 = vpow.pop %v438
    %v440 = vmul.f32 %v413, 1.442695
    %v441 = vpow.pop %v440
    %v442 = vmul.f32 %v414, 1.442695
    %v443 = vpow.pop %v442
    %v444 = vmul.f32 %v415, 1.442695
    %v445 = vpow.pop %v444
    %v446 = vmul.f32 %v416, 1.442695
    %v447 = vpow.pop %v446
    %v448 = vmul.f32 %v417, 1.442695
    %v449 = vpow.pop %v448
    %450 = vadd.xlane.f32.xlu0 %v419
    %v451 = vpop.xlane.xlu0 %450
    %452 = vadd.xlane.f32.xlu0 %v421
    %v453 = vpop.xlane.xlu0 %452
    %454 = vadd.xlane.f32.xlu0 %v423
    %v455 = vpop.xlane.xlu0 %454
    %456 = vadd.xlane.f32.xlu0 %v425
    %v457 = vpop.xlane.xlu0 %456
    %458 = vadd.xlane.f32.xlu0 %v427
    %v459 = vpop.xlane.xlu0 %458
    %460 = vadd.xlane.f32.xlu0 %v429
    %v461 = vpop.xlane.xlu0 %460
    %462 = vadd.xlane.f32.xlu0 %v431
    %v463 = vpop.xlane.xlu0 %462
    %464 = vadd.xlane.f32.xlu0 %v433
    %v465 = vpop.xlane.xlu0 %464
    %466 = vadd.xlane.f32.xlu0 %v435
    %v467 = vpop.xlane.xlu0 %466
    %468 = vadd.xlane.f32.xlu0 %v437
    %v469 = vpop.xlane.xlu0 %468
    %470 = vadd.xlane.f32.xlu0 %v439
    %v471 = vpop.xlane.xlu0 %470
    %472 = vadd.xlane.f32.xlu0 %v441
    %v473 = vpop.xlane.xlu0 %472
    %474 = vadd.xlane.f32.xlu0 %v443
    %v475 = vpop.xlane.xlu0 %474
    %476 = vadd.xlane.f32.xlu0 %v445
    %v477 = vpop.xlane.xlu0 %476
    %478 = vadd.xlane.f32.xlu0 %v447
    %v479 = vpop.xlane.xlu0 %478
    %480 = vadd.xlane.f32.xlu0 %v449
    %v481 = vpop.xlane.xlu0 %480
    %v482 = vlog2.pop %v451
    %v483 = vmul.f32 %v482, 0.6931472
    %v484 = vlog2.pop %v453
    %v485 = vmul.f32 %v484, 0.6931472
    %v486 = vlog2.pop %v455
    %v487 = vmul.f32 %v486, 0.6931472
    %v488 = vlog2.pop %v457
    %v489 = vmul.f32 %v488, 0.6931472
    %v490 = vlog2.pop %v459
    %v491 = vmul.f32 %v490, 0.6931472
    %v492 = vlog2.pop %v461
    %v493 = vmul.f32 %v492, 0.6931472
    %v494 = vlog2.pop %v463
    %v495 = vmul.f32 %v494, 0.6931472
    %v496 = vlog2.pop %v465
    %v497 = vmul.f32 %v496, 0.6931472
    %v498 = vlog2.pop %v467
    %v499 = vmul.f32 %v498, 0.6931472
    %v500 = vlog2.pop %v469
    %v501 = vmul.f32 %v500, 0.6931472
    %v502 = vlog2.pop %v471
    %v503 = vmul.f32 %v502, 0.6931472
    %v504 = vlog2.pop %v473
    %v505 = vmul.f32 %v504, 0.6931472
    %v506 = vlog2.pop %v475
    %v507 = vmul.f32 %v506, 0.6931472
    %v508 = vlog2.pop %v477
    %v509 = vmul.f32 %v508, 0.6931472
    %v510 = vlog2.pop %v479
    %v511 = vmul.f32 %v510, 0.6931472
    %v512 = vlog2.pop %v481
    %v513 = vmul.f32 %v512, 0.6931472
    %v514 = vsub.f32 %v402, %v483
    %v515 = vsub.f32 %v403, %v485
    %v516 = vsub.f32 %v404, %v487
    %v517 = vsub.f32 %v405, %v489
    %v518 = vsub.f32 %v406, %v491
    %v519 = vsub.f32 %v407, %v493
    %v520 = vsub.f32 %v408, %v495
    %v521 = vsub.f32 %v409, %v497
    %v522 = vsub.f32 %v410, %v499
    %v523 = vsub.f32 %v411, %v501
    %v524 = vsub.f32 %v412, %v503
    %v525 = vsub.f32 %v413, %v505
    %v526 = vsub.f32 %v414, %v507
    %v527 = vsub.f32 %v415, %v509
    %v528 = vsub.f32 %v416, %v511
    %v529 = vsub.f32 %v417, %v513
    %530 = vst [vmem:[%s3] sm:$0xff] %v514
    %531 = vst [vmem:[%s3 + $0x8] sm:$0xff] %v515
    %532 = vst [vmem:[%s3 + $0x10] sm:$0xff] %v516
    %533 = vst [vmem:[%s3 + $0x18] sm:$0xff] %v517
    %534 = vst [vmem:[%s3 + $0x20] sm:$0xff] %v518
    %535 = vst [vmem:[%s3 + $0x28] sm:$0xff] %v519
    %536 = vst [vmem:[%s3 + $0x30] sm:$0xff] %v520
    %537 = vst [vmem:[%s3 + $0x38] sm:$0xff] %v521
    %538 = vst [vmem:[%s3 + $0x40] sm:$0xff] %v522
    %539 = vst [vmem:[%s3 + $0x48] sm:$0xff] %v523
    %540 = vst [vmem:[%s3 + $0x50] sm:$0xff] %v524
    %541 = vst [vmem:[%s3 + $0x58] sm:$0xff] %v525
    %542 = vst [vmem:[%s3 + $0x60] sm:$0xff] %v526
    %543 = vst [vmem:[%s3 + $0x68] sm:$0xff] %v527
    %544 = vst [vmem:[%s3 + $0x70] sm:$0xff] %v528
    %545 = vst [vmem:[%s3 + $0x78] sm:$0xff] %v529
  $region21: #{appnp_forward.11} parent=0 // pred_fallthru
    _
  // Predicated region
  $region22: #{appnp_forward.11} parent=0 // pred_check
    _
  $region23: #{appnp_forward.11} parent=0 // pred_check_branch
    %547 = sbr.rel (0) target = $region25
  $region24: #{appnp_forward.11} parent=0 // pred_region
    _
  $region25: #{appnp_forward.11} parent=0 // pred_fallthru
    _
  // Predicated region
  $region26: #{appnp_forward.11} parent=0 // pred_check
    _
  $region27: #{appnp_forward.11} parent=0 // pred_check_branch
    %549 = sbr.rel (0) target = $region29
  $region28: #{appnp_forward.11} parent=0 // pred_region
    _
  $region29: #{appnp_forward.11} parent=0 // pred_fallthru
    _

</llo_original>
